<compile_context>
chip_gen: v7x
topology: tpu7x:2x2x1
jax: 0.10.0
libtpu: 0.0.40
codegen_flags: <defaults>
</compile_context>

<pallas_src>
import functools

import jax
import jax.numpy as jnp
from jax import lax
from jax.experimental import pallas as pl
from jax.experimental.pallas import tpu as pltpu
import numpy as np


def _round_up(x, m):
    return ((x + m - 1) // m) * m


def _pick_time_block(T, max_tb):
    tb = min(T, max(1, max_tb))
    while T % tb:
        tb -= 1
    return tb


# ----------------------------- Pallas kernel --------------------------------

def _lstm_recurrence_kernel(gx_ref, whh_ref, wfc_ref, bfc_ref, out_ref,
                            h_ref, c_ref, hsum_ref, *, tb, seq_len, hp):
    """Recurrent part only.  gx_ref: (Tb, Bt, 4*Hp) precomputed x-projection+bias."""
    t_blk = pl.program_id(1)

    @pl.when(t_blk == 0)
    def _():
        h_ref[...] = jnp.zeros_like(h_ref)
        c_ref[...] = jnp.zeros_like(c_ref)
        hsum_ref[...] = jnp.zeros_like(hsum_ref)

    # Resident recurrent weight; loaded once per grid step (hoisted out of loop).
    whh = whh_ref[...]                                    # (Hp, 4*Hp)

    def step(s, carry):
        h, c, hsum = carry
        # gates already contain x_t @ W_ih^T + b_ih + b_hh; add only h @ W_hh^T.
        gates = gx_ref[s] + jnp.dot(h.astype(whh.dtype), whh,
                                    preferred_element_type=jnp.float32)
        # Lane-aligned gate slabs (each slice is a multiple of 128 lanes wide).
        i_g = jax.nn.sigmoid(gates[:, 0 * hp:1 * hp])
        f_g = jax.nn.sigmoid(gates[:, 1 * hp:2 * hp])
        g_g = jnp.tanh(gates[:, 2 * hp:3 * hp])
        o_g = jax.nn.sigmoid(gates[:, 3 * hp:4 * hp])
        c = f_g * c + i_g * g_g
        h = o_g * jnp.tanh(c)
        return h, c, hsum + h

    carry0 = (h_ref[...], c_ref[...], hsum_ref[...])
    h, c, hsum = lax.fori_loop(0, tb, step, carry0, unroll=True)

    h_ref[...] = h
    c_ref[...] = c
    hsum_ref[...] = hsum

    @pl.when(t_blk == pl.num_programs(1) - 1)
    def _():
        h_mean = hsum * (1.0 / seq_len)
        out_ref[...] = (jnp.dot(h_mean.astype(wfc_ref.dtype), wfc_ref[...],
                                preferred_element_type=jnp.float32)
                        + bfc_ref[...]).astype(out_ref.dtype)


def _lstm_pallas(gx, w_hh_t, w_fc_t, b_fc, *, seq_len, tb, bt, hp, cp):
    """gx: (T, B_pad, 4*Hp) f32. Returns (B_pad, Cp) f32 logits (padded)."""
    T, b_pad, G = gx.shape
    n_t = T // tb
    n_b = b_pad // bt

    kernel = functools.partial(_lstm_recurrence_kernel,
                               tb=tb, seq_len=seq_len, hp=hp)

    grid_spec = pltpu.PrefetchScalarGridSpec(
        num_scalar_prefetch=0,
        grid=(n_b, n_t),
        in_specs=[
            # Precomputed input-projection slab for this (batch tile, time block).
            pl.BlockSpec((tb, bt, G), lambda i, t: (t, i, 0)),
            # Resident weights (constant index_map).  For very large H on v7x,
            # cast to bf16 (see wrapper) and/or single-buffer to fit 64 MiB VMEM.
            pl.BlockSpec((hp, G), lambda i, t: (0, 0)),     # W_hh^T (padded)
            pl.BlockSpec((hp, cp), lambda i, t: (0, 0)),    # W_fc^T (padded)
            pl.BlockSpec((1, cp), lambda i, t: (0, 0)),     # b_fc   (padded)
        ],
        out_specs=pl.BlockSpec((bt, cp), lambda i, t: (i, 0)),
        scratch_shapes=[pltpu.VMEM((bt, hp), jnp.float32),   # h state
                        pltpu.VMEM((bt, hp), jnp.float32),   # c state
                        pltpu.VMEM((bt, hp), jnp.float32)],  # running sum of h_t
    )

    return pl.pallas_call(
        kernel,
        out_shape=jax.ShapeDtypeStruct((b_pad, cp), jnp.float32),
        grid_spec=grid_spec,
        compiler_params=pltpu.CompilerParams(
            # batch tiles are independent (v7x megacore); time is a recurrence.
            dimension_semantics=("parallel", "arbitrary")),
    )(gx, w_hh_t, w_fc_t, b_fc)


# ----------------------------- Weight preparation ----------------------------

def _prepare_weights(params, hp, cp):
    """Pad per-gate slabs to Hp lanes and FC output to Cp lanes."""
    w_ih = params["w_ih"]            # (4H, E), PyTorch gate order i,f,g,o
    w_hh = params["w_hh"]            # (4H, H)
    H = w_hh.shape[1]
    E = w_ih.shape[1]

    def pad_to(a, axis, n):
        pads = [(0, 0)] * a.ndim
        pads[axis] = (0, n - a.shape[axis])
        return jnp.pad(a, pads)

    # (4H, E) -> (E, 4, Hp) -> (E, 4*Hp): each gate is a lane-aligned slab.
    w_ih_t = pad_to(w_ih.reshape(4, H, E).transpose(2, 0, 1), 2, hp)
    w_ih_t = w_ih_t.reshape(E, 4 * hp)

    # (4H, H) -> (Hp_in, 4, Hp_out) -> (Hp, 4*Hp); padded rows/cols are zero.
    w_hh_t = w_hh.reshape(4, H, H).transpose(2, 0, 1)
    w_hh_t = pad_to(pad_to(w_hh_t, 2, hp), 0, hp).reshape(hp, 4 * hp)

    # Combined bias, padded per gate (padded lanes -> 0 so padded c/h stay 0).
    b_gate = pad_to((params["b_ih"] + params["b_hh"]).reshape(4, H), 1, hp)
    b_gate = b_gate.reshape(4 * hp)

    w_fc_t = pad_to(pad_to(params["w_fc"].T, 0, hp), 1, cp)   # (Hp, Cp)
    b_fc = pad_to(params["b_fc"], 0, cp)[None, :]             # (1, Cp)
    return w_ih_t, w_hh_t, b_gate, w_fc_t, b_fc


# ----------------------------- Model wrapper ---------------------------------

def init_params(key, vocab_size, embedding_dim, hidden_size, num_classes,
                pad_idx=0):
    ks = jax.random.split(key, 7)
    scale = 0.1
    emb = scale * jax.random.normal(ks[0], (vocab_size, embedding_dim),
                                    jnp.float32)
    emb = emb.at[pad_idx].set(0.0)  # padding_idx row zeroed (as in nn.Embedding)
    w_ih = scale * jax.random.normal(ks[1], (4 * hidden_size, embedding_dim),
                                     jnp.float32)
    w_hh = scale * jax.random.normal(ks[2], (4 * hidden_size, hidden_size),
                                     jnp.float32)
    b_ih = scale * jax.random.normal(ks[3], (4 * hidden_size,), jnp.float32)
    b_hh = scale * jax.random.normal(ks[4], (4 * hidden_size,), jnp.float32)
    w_fc = scale * jax.random.normal(ks[5], (num_classes, hidden_size),
                                     jnp.float32)
    b_fc = scale * jax.random.normal(ks[6], (num_classes,), jnp.float32)
    return dict(emb=emb, w_ih=w_ih, w_hh=w_hh, b_ih=b_ih, b_hh=b_hh,
                w_fc=w_fc, b_fc=b_fc)


def lstm_forward(params, x_ids, *, time_block=32, use_bf16_weights=False):
    """x_ids: (B, T) int32 token ids. Returns logits (B, num_classes) f32."""
    B, T = x_ids.shape
    H = params["w_hh"].shape[1]
    C = params["w_fc"].shape[0]

    hp = _round_up(H, 128)           # lane-aligned gate width
    cp = _round_up(C, 128)           # lane-dense FC output
    b_pad = _round_up(B, 8)          # f32 sublane multiple
    if b_pad > 128:
        b_pad = _round_up(b_pad, 128)
        bt = 128
    else:
        bt = b_pad

    w_ih_t, w_hh_t, b_gate, w_fc_t, b_fc = _prepare_weights(params, hp, cp)

    # Embedding lookup (gather, glue) + batch padding with zero rows.
    # TODO(synk): the gather could be fused in-kernel via scalar-prefetched ids
    # and pl.Element row-gather; kept in the wrapper here.
    embedded = params["emb"][x_ids]                              # (B, T, E)
    embedded = jnp.pad(embedded, ((0, b_pad - B), (0, 0), (0, 0)))

    # Hoisted input projection for ALL time steps as one big matmul, emitted
    # directly time-major (no standalone transpose).  Biases folded in.
    gx = jnp.einsum("bte,eg->tbg", embedded, w_ih_t) + b_gate[None, None, :]
    gx = gx.astype(jnp.float32)                                  # (T, B_pad, 4*Hp)

    if use_bf16_weights:
        # bf16 matmul weights for v6e/v7x; activations / state / gates stay f32.
        w_hh_t = w_hh_t.astype(jnp.bfloat16)
        w_fc_t = w_fc_t.astype(jnp.bfloat16)

    tb = _pick_time_block(T, time_block)
    out = _lstm_pallas(gx, w_hh_t, w_fc_t, b_fc,
                       seq_len=T, tb=tb, bt=bt, hp=hp, cp=cp)
    return out[:B, :C]


# ----------------------------- Pure-JAX reference ----------------------------

def lstm_reference(params, x_ids):
    B, T = x_ids.shape
    H = params["w_hh"].shape[1]
    embedded = params["emb"][x_ids]                      # (B, T, E)

    def step(carry, x_t):
        h, c = carry
        gates = (x_t @ params["w_ih"].T + params["b_ih"]
                 + h @ params["w_hh"].T + params["b_hh"])
        i, f, g, o = jnp.split(gates, 4, axis=-1)
        i, f, o = jax.nn.sigmoid(i), jax.nn.sigmoid(f), jax.nn.sigmoid(o)
        g = jnp.tanh(g)
        c_new = f * c + i * g
        h_new = o * jnp.tanh(c_new)
        return (h_new, c_new), h_new

    h0 = jnp.zeros((B, H), jnp.float32)
    c0 = jnp.zeros((B, H), jnp.float32)
    _, hs = jax.lax.scan(step, (h0, c0), jnp.transpose(embedded, (1, 0, 2)))
    hs = jnp.transpose(hs, (1, 0, 2))                    # (B, T, H)
    logits = hs @ params["w_fc"].T + params["b_fc"]      # (B, T, C)
    return logits.mean(axis=1)


# ----------------------------- Main ------------------------------------------

if __name__ == "__main__":
    vocab_size = 20
    embedding_dim = 32
    hidden_size = 32
    num_classes = 4
    batch = 2
    seq_len = 8
    pad_idx = 0

    key = jax.random.PRNGKey(0)
    k_param, k_data = jax.random.split(key)
    params = init_params(k_param, vocab_size, embedding_dim, hidden_size,
                         num_classes, pad_idx)

    x_ids = jax.random.randint(k_data, (batch, seq_len), 0, vocab_size,
                               dtype=jnp.int32)
    # force some padding tokens to exercise padding_idx row
    x_ids = x_ids.at[0, -2:].set(pad_idx)

    ref = jax.block_until_ready(lstm_reference(params, x_ids))

    # f32 path (all chips).
    out_f32 = jax.block_until_ready(lstm_forward(params, x_ids))
    assert out_f32.shape == (batch, num_classes)
    np.testing.assert_allclose(np.asarray(out_f32), np.asarray(ref),
                               rtol=2e-4, atol=2e-5)

    # bf16-weight path (v6e/v7x optimization); looser tolerance.
    out_bf16 = jax.block_until_ready(
        lstm_forward(params, x_ids, use_bf16_weights=True))
    np.testing.assert_allclose(np.asarray(out_bf16), np.asarray(ref),
                               rtol=5e-2, atol=5e-2)

    print("KERNEL_OK")
</pallas_src>

<mosaic_0001>
module attributes {stable_mosaic.version = 11 : i64} {
  func.func @_lstm_recurrence_kernel(%arg0: i32, %arg1: i32, %arg2: memref<8x8x512xf32, #tpu.memory_space<vmem>>, %arg3: memref<128x512xf32, #tpu.memory_space<vmem>>, %arg4: memref<128x128xf32, #tpu.memory_space<vmem>>, %arg5: memref<1x128xf32, #tpu.memory_space<vmem>>, %arg6: memref<8x128xf32, #tpu.memory_space<vmem>>, %arg7: memref<8x128xf32, #tpu.memory_space<vmem>>, %arg8: memref<8x128xf32, #tpu.memory_space<vmem>>, %arg9: memref<8x128xf32, #tpu.memory_space<vmem>>) attributes {dimension_semantics = [#tpu.dimension_semantics<parallel>, #tpu.dimension_semantics<arbitrary>], iteration_bounds = array<i64: 1, 1>, scalar_prefetch = 0 : i64, scratch_operands = 3 : i64, tpu.core_type = #tpu.core_type<tc>, window_params = [{transform_indices = @transform_0, window_bounds = array<i64: 8, 8, 512>}, {pipeline_mode = #tpu.pipeline_mode<synchronous>, transform_indices = @transform_1, window_bounds = array<i64: 128, 512>}, {pipeline_mode = #tpu.pipeline_mode<synchronous>, transform_indices = @transform_2, window_bounds = array<i64: 128, 128>}, {pipeline_mode = #tpu.pipeline_mode<synchronous>, transform_indices = @transform_3, window_bounds = array<i64: 1, 128>}, {transform_indices = @transform_4, window_bounds = array<i64: 8, 128>}]} {
    %c0_i32 = arith.constant 0 : i32
    %0 = arith.cmpi eq, %arg1, %c0_i32 : i32
    %1 = arith.extui %0 : i1 to i32
    %c0_i32_0 = arith.constant 0 : i32
    %2 = arith.cmpi ne, %1, %c0_i32_0 : i32
    scf.if %2 {
      %cst_64 = arith.constant 0.000000e+00 : f32
      %261 = vector.broadcast %cst_64 : f32 to vector<8x128xf32>
      %c0_65 = arith.constant 0 : index
      %c0_66 = arith.constant 0 : index
      %262 = vector.load %arg7[%c0_65, %c0_66] : memref<8x128xf32, #tpu.memory_space<vmem>>, vector<8x128xf32>
      tpu.vector_store %arg7[%c0_65, %c0_66], %261 {strides = array<i32>} : memref<8x128xf32, #tpu.memory_space<vmem>>, vector<8x128xf32>,
      %cst_67 = arith.constant 0.000000e+00 : f32
      %263 = vector.broadcast %cst_67 : f32 to vector<8x128xf32>
      %c0_68 = arith.constant 0 : index
      %c0_69 = arith.constant 0 : index
      %264 = vector.load %arg8[%c0_68, %c0_69] : memref<8x128xf32, #tpu.memory_space<vmem>>, vector<8x128xf32>
      tpu.vector_store %arg8[%c0_68, %c0_69], %263 {strides = array<i32>} : memref<8x128xf32, #tpu.memory_space<vmem>>, vector<8x128xf32>,
      %cst_70 = arith.constant 0.000000e+00 : f32
      %265 = vector.broadcast %cst_70 : f32 to vector<8x128xf32>
      %c0_71 = arith.constant 0 : index
      %c0_72 = arith.constant 0 : index
      %266 = vector.load %arg9[%c0_71, %c0_72] : memref<8x128xf32, #tpu.memory_space<vmem>>, vector<8x128xf32>
      tpu.vector_store %arg9[%c0_71, %c0_72], %265 {strides = array<i32>} : memref<8x128xf32, #tpu.memory_space<vmem>>, vector<8x128xf32>,
    } else {
    }
    %c0 = arith.constant 0 : index
    %c0_1 = arith.constant 0 : index
    %3 = vector.load %arg3[%c0, %c0_1] : memref<128x512xf32, #tpu.memory_space<vmem>>, vector<128x512xf32>
    %c0_2 = arith.constant 0 : index
    %c0_3 = arith.constant 0 : index
    %4 = vector.load %arg7[%c0_2, %c0_3] : memref<8x128xf32, #tpu.memory_space<vmem>>, vector<8x128xf32>
    %c0_4 = arith.constant 0 : index
    %c0_5 = arith.constant 0 : index
    %5 = vector.load %arg8[%c0_4, %c0_5] : memref<8x128xf32, #tpu.memory_space<vmem>>, vector<8x128xf32>
    %c0_6 = arith.constant 0 : index
    %c0_7 = arith.constant 0 : index
    %6 = vector.load %arg9[%c0_6, %c0_7] : memref<8x128xf32, #tpu.memory_space<vmem>>, vector<8x128xf32>
    %c0_i32_8 = arith.constant 0 : i32
    %7 = arith.index_cast %c0_i32_8 : i32 to index
    %c0_9 = arith.constant 0 : index
    %c0_10 = arith.constant 0 : index
    %8 = vector.load %arg2[%7, %c0_9, %c0_10] : memref<8x8x512xf32, #tpu.memory_space<vmem>>, vector<1x8x512xf32>
    %9 = vector.shape_cast %8 : vector<1x8x512xf32> to vector<8x512xf32>
    %cst = arith.constant dense<0.000000e+00> : vector<8x512xf32>
    %10 = tpu.matmul %4, %3, %cst {dimension_numbers = #tpu.dot_dimension_numbers<[1], [0], [0], [1], [0, 0, 1, 1], [], []>} : vector<8x128xf32>, vector<128x512xf32>, vector<8x512xf32> -> vector<8x512xf32>
    %11 = arith.addf %9, %10 : vector<8x512xf32>
    %12 = vector.extract_strided_slice %11 {offsets = [0, 0], sizes = [8, 128], strides = [1, 1]} : vector<8x512xf32> to vector<8x128xf32>
    %13 = arith.negf %12 : vector<8x128xf32>
    %14 = math.exp %13 : vector<8x128xf32>
    %cst_11 = arith.constant 1.000000e+00 : f32
    %15 = vector.broadcast %cst_11 : f32 to vector<8x128xf32>
    %16 = arith.addf %15, %14 : vector<8x128xf32>
    %17 = arith.divf %15, %16 : vector<8x128xf32>
    %18 = vector.extract_strided_slice %11 {offsets = [0, 128], sizes = [8, 128], strides = [1, 1]} : vector<8x512xf32> to vector<8x128xf32>
    %19 = arith.negf %18 : vector<8x128xf32>
    %20 = math.exp %19 : vector<8x128xf32>
    %cst_12 = arith.constant 1.000000e+00 : f32
    %21 = vector.broadcast %cst_12 : f32 to vector<8x128xf32>
    %22 = arith.addf %21, %20 : vector<8x128xf32>
    %23 = arith.divf %21, %22 : vector<8x128xf32>
    %24 = vector.extract_strided_slice %11 {offsets = [0, 256], sizes = [8, 128], strides = [1, 1]} : vector<8x512xf32> to vector<8x128xf32>
    %25 = math.tanh %24 : vector<8x128xf32>
    %26 = vector.extract_strided_slice %11 {offsets = [0, 384], sizes = [8, 128], strides = [1, 1]} : vector<8x512xf32> to vector<8x128xf32>
    %27 = arith.negf %26 : vector<8x128xf32>
    %28 = math.exp %27 : vector<8x128xf32>
    %cst_13 = arith.constant 1.000000e+00 : f32
    %29 = vector.broadcast %cst_13 : f32 to vector<8x128xf32>
    %30 = arith.addf %29, %28 : vector<8x128xf32>
    %31 = arith.divf %29, %30 : vector<8x128xf32>
    %32 = arith.mulf %23, %5 : vector<8x128xf32>
    %33 = arith.mulf %17, %25 : vector<8x128xf32>
    %34 = arith.addf %32, %33 : vector<8x128xf32>
    %35 = math.tanh %34 : vector<8x128xf32>
    %36 = arith.mulf %31, %35 : vector<8x128xf32>
    %37 = arith.addf %6, %36 : vector<8x128xf32>
    %c1_i32 = arith.constant 1 : i32
    %38 = arith.index_cast %c1_i32 : i32 to index
    %c0_14 = arith.constant 0 : index
    %c0_15 = arith.constant 0 : index
    %39 = vector.load %arg2[%38, %c0_14, %c0_15] : memref<8x8x512xf32, #tpu.memory_space<vmem>>, vector<1x8x512xf32>
    %40 = vector.shape_cast %39 : vector<1x8x512xf32> to vector<8x512xf32>
    %cst_16 = arith.constant dense<0.000000e+00> : vector<8x512xf32>
    %41 = tpu.matmul %36, %3, %cst_16 {dimension_numbers = #tpu.dot_dimension_numbers<[1], [0], [0], [1], [0, 0, 1, 1], [], []>} : vector<8x128xf32>, vector<128x512xf32>, vector<8x512xf32> -> vector<8x512xf32>
    %42 = arith.addf %40, %41 : vector<8x512xf32>
    %43 = vector.extract_strided_slice %42 {offsets = [0, 0], sizes = [8, 128], strides = [1, 1]} : vector<8x512xf32> to vector<8x128xf32>
    %44 = arith.negf %43 : vector<8x128xf32>
    %45 = math.exp %44 : vector<8x128xf32>
    %cst_17 = arith.constant 1.000000e+00 : f32
    %46 = vector.broadcast %cst_17 : f32 to vector<8x128xf32>
    %47 = arith.addf %46, %45 : vector<8x128xf32>
    %48 = arith.divf %46, %47 : vector<8x128xf32>
    %49 = vector.extract_strided_slice %42 {offsets = [0, 128], sizes = [8, 128], strides = [1, 1]} : vector<8x512xf32> to vector<8x128xf32>
    %50 = arith.negf %49 : vector<8x128xf32>
    %51 = math.exp %50 : vector<8x128xf32>
    %cst_18 = arith.constant 1.000000e+00 : f32
    %52 = vector.broadcast %cst_18 : f32 to vector<8x128xf32>
    %53 = arith.addf %52, %51 : vector<8x128xf32>
    %54 = arith.divf %52, %53 : vector<8x128xf32>
    %55 = vector.extract_strided_slice %42 {offsets = [0, 256], sizes = [8, 128], strides = [1, 1]} : vector<8x512xf32> to vector<8x128xf32>
    %56 = math.tanh %55 : vector<8x128xf32>
    %57 = vector.extract_strided_slice %42 {offsets = [0, 384], sizes = [8, 128], strides = [1, 1]} : vector<8x512xf32> to vector<8x128xf32>
    %58 = arith.negf %57 : vector<8x128xf32>
    %59 = math.exp %58 : vector<8x128xf32>
    %cst_19 = arith.constant 1.000000e+00 : f32
    %60 = vector.broadcast %cst_19 : f32 to vector<8x128xf32>
    %61 = arith.addf %60, %59 : vector<8x128xf32>
    %62 = arith.divf %60, %61 : vector<8x128xf32>
    %63 = arith.mulf %54, %34 : vector<8x128xf32>
    %64 = arith.mulf %48, %56 : vector<8x128xf32>
    %65 = arith.addf %63, %64 : vector<8x128xf32>
    %66 = math.tanh %65 : vector<8x128xf32>
    %67 = arith.mulf %62, %66 : vector<8x128xf32>
    %68 = arith.addf %37, %67 : vector<8x128xf32>
    %c2_i32 = arith.constant 2 : i32
    %69 = arith.index_cast %c2_i32 : i32 to index
    %c0_20 = arith.constant 0 : index
    %c0_21 = arith.constant 0 : index
    %70 = vector.load %arg2[%69, %c0_20, %c0_21] : memref<8x8x512xf32, #tpu.memory_space<vmem>>, vector<1x8x512xf32>
    %71 = vector.shape_cast %70 : vector<1x8x512xf32> to vector<8x512xf32>
    %cst_22 = arith.constant dense<0.000000e+00> : vector<8x512xf32>
    %72 = tpu.matmul %67, %3, %cst_22 {dimension_numbers = #tpu.dot_dimension_numbers<[1], [0], [0], [1], [0, 0, 1, 1], [], []>} : vector<8x128xf32>, vector<128x512xf32>, vector<8x512xf32> -> vector<8x512xf32>
    %73 = arith.addf %71, %72 : vector<8x512xf32>
    %74 = vector.extract_strided_slice %73 {offsets = [0, 0], sizes = [8, 128], strides = [1, 1]} : vector<8x512xf32> to vector<8x128xf32>
    %75 = arith.negf %74 : vector<8x128xf32>
    %76 = math.exp %75 : vector<8x128xf32>
    %cst_23 = arith.constant 1.000000e+00 : f32
    %77 = vector.broadcast %cst_23 : f32 to vector<8x128xf32>
    %78 = arith.addf %77, %76 : vector<8x128xf32>
    %79 = arith.divf %77, %78 : vector<8x128xf32>
    %80 = vector.extract_strided_slice %73 {offsets = [0, 128], sizes = [8, 128], strides = [1, 1]} : vector<8x512xf32> to vector<8x128xf32>
    %81 = arith.negf %80 : vector<8x128xf32>
    %82 = math.exp %81 : vector<8x128xf32>
    %cst_24 = arith.constant 1.000000e+00 : f32
    %83 = vector.broadcast %cst_24 : f32 to vector<8x128xf32>
    %84 = arith.addf %83, %82 : vector<8x128xf32>
    %85 = arith.divf %83, %84 : vector<8x128xf32>
    %86 = vector.extract_strided_slice %73 {offsets = [0, 256], sizes = [8, 128], strides = [1, 1]} : vector<8x512xf32> to vector<8x128xf32>
    %87 = math.tanh %86 : vector<8x128xf32>
    %88 = vector.extract_strided_slice %73 {offsets = [0, 384], sizes = [8, 128], strides = [1, 1]} : vector<8x512xf32> to vector<8x128xf32>
    %89 = arith.negf %88 : vector<8x128xf32>
    %90 = math.exp %89 : vector<8x128xf32>
    %cst_25 = arith.constant 1.000000e+00 : f32
    %91 = vector.broadcast %cst_25 : f32 to vector<8x128xf32>
    %92 = arith.addf %91, %90 : vector<8x128xf32>
    %93 = arith.divf %91, %92 : vector<8x128xf32>
    %94 = arith.mulf %85, %65 : vector<8x128xf32>
    %95 = arith.mulf %79, %87 : vector<8x128xf32>
    %96 = arith.addf %94, %95 : vector<8x128xf32>
    %97 = math.tanh %96 : vector<8x128xf32>
    %98 = arith.mulf %93, %97 : vector<8x128xf32>
    %99 = arith.addf %68, %98 : vector<8x128xf32>
    %c3_i32 = arith.constant 3 : i32
    %100 = arith.index_cast %c3_i32 : i32 to index
    %c0_26 = arith.constant 0 : index
    %c0_27 = arith.constant 0 : index
    %101 = vector.load %arg2[%100, %c0_26, %c0_27] : memref<8x8x512xf32, #tpu.memory_space<vmem>>, vector<1x8x512xf32>
    %102 = vector.shape_cast %101 : vector<1x8x512xf32> to vector<8x512xf32>
    %cst_28 = arith.constant dense<0.000000e+00> : vector<8x512xf32>
    %103 = tpu.matmul %98, %3, %cst_28 {dimension_numbers = #tpu.dot_dimension_numbers<[1], [0], [0], [1], [0, 0, 1, 1], [], []>} : vector<8x128xf32>, vector<128x512xf32>, vector<8x512xf32> -> vector<8x512xf32>
    %104 = arith.addf %102, %103 : vector<8x512xf32>
    %105 = vector.extract_strided_slice %104 {offsets = [0, 0], sizes = [8, 128], strides = [1, 1]} : vector<8x512xf32> to vector<8x128xf32>
    %106 = arith.negf %105 : vector<8x128xf32>
    %107 = math.exp %106 : vector<8x128xf32>
    %cst_29 = arith.constant 1.000000e+00 : f32
    %108 = vector.broadcast %cst_29 : f32 to vector<8x128xf32>
    %109 = arith.addf %108, %107 : vector<8x128xf32>
    %110 = arith.divf %108, %109 : vector<8x128xf32>
    %111 = vector.extract_strided_slice %104 {offsets = [0, 128], sizes = [8, 128], strides = [1, 1]} : vector<8x512xf32> to vector<8x128xf32>
    %112 = arith.negf %111 : vector<8x128xf32>
    %113 = math.exp %112 : vector<8x128xf32>
    %cst_30 = arith.constant 1.000000e+00 : f32
    %114 = vector.broadcast %cst_30 : f32 to vector<8x128xf32>
    %115 = arith.addf %114, %113 : vector<8x128xf32>
    %116 = arith.divf %114, %115 : vector<8x128xf32>
    %117 = vector.extract_strided_slice %104 {offsets = [0, 256], sizes = [8, 128], strides = [1, 1]} : vector<8x512xf32> to vector<8x128xf32>
    %118 = math.tanh %117 : vector<8x128xf32>
    %119 = vector.extract_strided_slice %104 {offsets = [0, 384], sizes = [8, 128], strides = [1, 1]} : vector<8x512xf32> to vector<8x128xf32>
    %120 = arith.negf %119 : vector<8x128xf32>
    %121 = math.exp %120 : vector<8x128xf32>
    %cst_31 = arith.constant 1.000000e+00 : f32
    %122 = vector.broadcast %cst_31 : f32 to vector<8x128xf32>
    %123 = arith.addf %122, %121 : vector<8x128xf32>
    %124 = arith.divf %122, %123 : vector<8x128xf32>
    %125 = arith.mulf %116, %96 : vector<8x128xf32>
    %126 = arith.mulf %110, %118 : vector<8x128xf32>
    %127 = arith.addf %125, %126 : vector<8x128xf32>
    %128 = math.tanh %127 : vector<8x128xf32>
    %129 = arith.mulf %124, %128 : vector<8x128xf32>
    %130 = arith.addf %99, %129 : vector<8x128xf32>
    %c4_i32 = arith.constant 4 : i32
    %131 = arith.index_cast %c4_i32 : i32 to index
    %c0_32 = arith.constant 0 : index
    %c0_33 = arith.constant 0 : index
    %132 = vector.load %arg2[%131, %c0_32, %c0_33] : memref<8x8x512xf32, #tpu.memory_space<vmem>>, vector<1x8x512xf32>
    %133 = vector.shape_cast %132 : vector<1x8x512xf32> to vector<8x512xf32>
    %cst_34 = arith.constant dense<0.000000e+00> : vector<8x512xf32>
    %134 = tpu.matmul %129, %3, %cst_34 {dimension_numbers = #tpu.dot_dimension_numbers<[1], [0], [0], [1], [0, 0, 1, 1], [], []>} : vector<8x128xf32>, vector<128x512xf32>, vector<8x512xf32> -> vector<8x512xf32>
    %135 = arith.addf %133, %134 : vector<8x512xf32>
    %136 = vector.extract_strided_slice %135 {offsets = [0, 0], sizes = [8, 128], strides = [1, 1]} : vector<8x512xf32> to vector<8x128xf32>
    %137 = arith.negf %136 : vector<8x128xf32>
    %138 = math.exp %137 : vector<8x128xf32>
    %cst_35 = arith.constant 1.000000e+00 : f32
    %139 = vector.broadcast %cst_35 : f32 to vector<8x128xf32>
    %140 = arith.addf %139, %138 : vector<8x128xf32>
    %141 = arith.divf %139, %140 : vector<8x128xf32>
    %142 = vector.extract_strided_slice %135 {offsets = [0, 128], sizes = [8, 128], strides = [1, 1]} : vector<8x512xf32> to vector<8x128xf32>
    %143 = arith.negf %142 : vector<8x128xf32>
    %144 = math.exp %143 : vector<8x128xf32>
    %cst_36 = arith.constant 1.000000e+00 : f32
    %145 = vector.broadcast %cst_36 : f32 to vector<8x128xf32>
    %146 = arith.addf %145, %144 : vector<8x128xf32>
    %147 = arith.divf %145, %146 : vector<8x128xf32>
    %148 = vector.extract_strided_slice %135 {offsets = [0, 256], sizes = [8, 128], strides = [1, 1]} : vector<8x512xf32> to vector<8x128xf32>
    %149 = math.tanh %148 : vector<8x128xf32>
    %150 = vector.extract_strided_slice %135 {offsets = [0, 384], sizes = [8, 128], strides = [1, 1]} : vector<8x512xf32> to vector<8x128xf32>
    %151 = arith.negf %150 : vector<8x128xf32>
    %152 = math.exp %151 : vector<8x128xf32>
    %cst_37 = arith.constant 1.000000e+00 : f32
    %153 = vector.broadcast %cst_37 : f32 to vector<8x128xf32>
    %154 = arith.addf %153, %152 : vector<8x128xf32>
    %155 = arith.divf %153, %154 : vector<8x128xf32>
    %156 = arith.mulf %147, %127 : vector<8x128xf32>
    %157 = arith.mulf %141, %149 : vector<8x128xf32>
    %158 = arith.addf %156, %157 : vector<8x128xf32>
    %159 = math.tanh %158 : vector<8x128xf32>
    %160 = arith.mulf %155, %159 : vector<8x128xf32>
    %161 = arith.addf %130, %160 : vector<8x128xf32>
    %c5_i32 = arith.constant 5 : i32
    %162 = arith.index_cast %c5_i32 : i32 to index
    %c0_38 = arith.constant 0 : index
    %c0_39 = arith.constant 0 : index
    %163 = vector.load %arg2[%162, %c0_38, %c0_39] : memref<8x8x512xf32, #tpu.memory_space<vmem>>, vector<1x8x512xf32>
    %164 = vector.shape_cast %163 : vector<1x8x512xf32> to vector<8x512xf32>
    %cst_40 = arith.constant dense<0.000000e+00> : vector<8x512xf32>
    %165 = tpu.matmul %160, %3, %cst_40 {dimension_numbers = #tpu.dot_dimension_numbers<[1], [0], [0], [1], [0, 0, 1, 1], [], []>} : vector<8x128xf32>, vector<128x512xf32>, vector<8x512xf32> -> vector<8x512xf32>
    %166 = arith.addf %164, %165 : vector<8x512xf32>
    %167 = vector.extract_strided_slice %166 {offsets = [0, 0], sizes = [8, 128], strides = [1, 1]} : vector<8x512xf32> to vector<8x128xf32>
    %168 = arith.negf %167 : vector<8x128xf32>
    %169 = math.exp %168 : vector<8x128xf32>
    %cst_41 = arith.constant 1.000000e+00 : f32
    %170 = vector.broadcast %cst_41 : f32 to vector<8x128xf32>
    %171 = arith.addf %170, %169 : vector<8x128xf32>
    %172 = arith.divf %170, %171 : vector<8x128xf32>
    %173 = vector.extract_strided_slice %166 {offsets = [0, 128], sizes = [8, 128], strides = [1, 1]} : vector<8x512xf32> to vector<8x128xf32>
    %174 = arith.negf %173 : vector<8x128xf32>
    %175 = math.exp %174 : vector<8x128xf32>
    %cst_42 = arith.constant 1.000000e+00 : f32
    %176 = vector.broadcast %cst_42 : f32 to vector<8x128xf32>
    %177 = arith.addf %176, %175 : vector<8x128xf32>
    %178 = arith.divf %176, %177 : vector<8x128xf32>
    %179 = vector.extract_strided_slice %166 {offsets = [0, 256], sizes = [8, 128], strides = [1, 1]} : vector<8x512xf32> to vector<8x128xf32>
    %180 = math.tanh %179 : vector<8x128xf32>
    %181 = vector.extract_strided_slice %166 {offsets = [0, 384], sizes = [8, 128], strides = [1, 1]} : vector<8x512xf32> to vector<8x128xf32>
    %182 = arith.negf %181 : vector<8x128xf32>
    %183 = math.exp %182 : vector<8x128xf32>
    %cst_43 = arith.constant 1.000000e+00 : f32
    %184 = vector.broadcast %cst_43 : f32 to vector<8x128xf32>
    %185 = arith.addf %184, %183 : vector<8x128xf32>
    %186 = arith.divf %184, %185 : vector<8x128xf32>
    %187 = arith.mulf %178, %158 : vector<8x128xf32>
    %188 = arith.mulf %172, %180 : vector<8x128xf32>
    %189 = arith.addf %187, %188 : vector<8x128xf32>
    %190 = math.tanh %189 : vector<8x128xf32>
    %191 = arith.mulf %186, %190 : vector<8x128xf32>
    %192 = arith.addf %161, %191 : vector<8x128xf32>
    %c6_i32 = arith.constant 6 : i32
    %193 = arith.index_cast %c6_i32 : i32 to index
    %c0_44 = arith.constant 0 : index
    %c0_45 = arith.constant 0 : index
    %194 = vector.load %arg2[%193, %c0_44, %c0_45] : memref<8x8x512xf32, #tpu.memory_space<vmem>>, vector<1x8x512xf32>
    %195 = vector.shape_cast %194 : vector<1x8x512xf32> to vector<8x512xf32>
    %cst_46 = arith.constant dense<0.000000e+00> : vector<8x512xf32>
    %196 = tpu.matmul %191, %3, %cst_46 {dimension_numbers = #tpu.dot_dimension_numbers<[1], [0], [0], [1], [0, 0, 1, 1], [], []>} : vector<8x128xf32>, vector<128x512xf32>, vector<8x512xf32> -> vector<8x512xf32>
    %197 = arith.addf %195, %196 : vector<8x512xf32>
    %198 = vector.extract_strided_slice %197 {offsets = [0, 0], sizes = [8, 128], strides = [1, 1]} : vector<8x512xf32> to vector<8x128xf32>
    %199 = arith.negf %198 : vector<8x128xf32>
    %200 = math.exp %199 : vector<8x128xf32>
    %cst_47 = arith.constant 1.000000e+00 : f32
    %201 = vector.broadcast %cst_47 : f32 to vector<8x128xf32>
    %202 = arith.addf %201, %200 : vector<8x128xf32>
    %203 = arith.divf %201, %202 : vector<8x128xf32>
    %204 = vector.extract_strided_slice %197 {offsets = [0, 128], sizes = [8, 128], strides = [1, 1]} : vector<8x512xf32> to vector<8x128xf32>
    %205 = arith.negf %204 : vector<8x128xf32>
    %206 = math.exp %205 : vector<8x128xf32>
    %cst_48 = arith.constant 1.000000e+00 : f32
    %207 = vector.broadcast %cst_48 : f32 to vector<8x128xf32>
    %208 = arith.addf %207, %206 : vector<8x128xf32>
    %209 = arith.divf %207, %208 : vector<8x128xf32>
    %210 = vector.extract_strided_slice %197 {offsets = [0, 256], sizes = [8, 128], strides = [1, 1]} : vector<8x512xf32> to vector<8x128xf32>
    %211 = math.tanh %210 : vector<8x128xf32>
    %212 = vector.extract_strided_slice %197 {offsets = [0, 384], sizes = [8, 128], strides = [1, 1]} : vector<8x512xf32> to vector<8x128xf32>
    %213 = arith.negf %212 : vector<8x128xf32>
    %214 = math.exp %213 : vector<8x128xf32>
    %cst_49 = arith.constant 1.000000e+00 : f32
    %215 = vector.broadcast %cst_49 : f32 to vector<8x128xf32>
    %216 = arith.addf %215, %214 : vector<8x128xf32>
    %217 = arith.divf %215, %216 : vector<8x128xf32>
    %218 = arith.mulf %209, %189 : vector<8x128xf32>
    %219 = arith.mulf %203, %211 : vector<8x128xf32>
    %220 = arith.addf %218, %219 : vector<8x128xf32>
    %221 = math.tanh %220 : vector<8x128xf32>
    %222 = arith.mulf %217, %221 : vector<8x128xf32>
    %223 = arith.addf %192, %222 : vector<8x128xf32>
    %c7_i32 = arith.constant 7 : i32
    %224 = arith.index_cast %c7_i32 : i32 to index
    %c0_50 = arith.constant 0 : index
    %c0_51 = arith.constant 0 : index
    %225 = vector.load %arg2[%224, %c0_50, %c0_51] : memref<8x8x512xf32, #tpu.memory_space<vmem>>, vector<1x8x512xf32>
    %226 = vector.shape_cast %225 : vector<1x8x512xf32> to vector<8x512xf32>
    %cst_52 = arith.constant dense<0.000000e+00> : vector<8x512xf32>
    %227 = tpu.matmul %222, %3, %cst_52 {dimension_numbers = #tpu.dot_dimension_numbers<[1], [0], [0], [1], [0, 0, 1, 1], [], []>} : vector<8x128xf32>, vector<128x512xf32>, vector<8x512xf32> -> vector<8x512xf32>
    %228 = arith.addf %226, %227 : vector<8x512xf32>
    %229 = vector.extract_strided_slice %228 {offsets = [0, 0], sizes = [8, 128], strides = [1, 1]} : vector<8x512xf32> to vector<8x128xf32>
    %230 = arith.negf %229 : vector<8x128xf32>
    %231 = math.exp %230 : vector<8x128xf32>
    %cst_53 = arith.constant 1.000000e+00 : f32
    %232 = vector.broadcast %cst_53 : f32 to vector<8x128xf32>
    %233 = arith.addf %232, %231 : vector<8x128xf32>
    %234 = arith.divf %232, %233 : vector<8x128xf32>
    %235 = vector.extract_strided_slice %228 {offsets = [0, 128], sizes = [8, 128], strides = [1, 1]} : vector<8x512xf32> to vector<8x128xf32>
    %236 = arith.negf %235 : vector<8x128xf32>
    %237 = math.exp %236 : vector<8x128xf32>
    %cst_54 = arith.constant 1.000000e+00 : f32
    %238 = vector.broadcast %cst_54 : f32 to vector<8x128xf32>
    %239 = arith.addf %238, %237 : vector<8x128xf32>
    %240 = arith.divf %238, %239 : vector<8x128xf32>
    %241 = vector.extract_strided_slice %228 {offsets = [0, 256], sizes = [8, 128], strides = [1, 1]} : vector<8x512xf32> to vector<8x128xf32>
    %242 = math.tanh %241 : vector<8x128xf32>
    %243 = vector.extract_strided_slice %228 {offsets = [0, 384], sizes = [8, 128], strides = [1, 1]} : vector<8x512xf32> to vector<8x128xf32>
    %244 = arith.negf %243 : vector<8x128xf32>
    %245 = math.exp %244 : vector<8x128xf32>
    %cst_55 = arith.constant 1.000000e+00 : f32
    %246 = vector.broadcast %cst_55 : f32 to vector<8x128xf32>
    %247 = arith.addf %246, %245 : vector<8x128xf32>
    %248 = arith.divf %246, %247 : vector<8x128xf32>
    %249 = arith.mulf %240, %220 : vector<8x128xf32>
    %250 = arith.mulf %234, %242 : vector<8x128xf32>
    %251 = arith.addf %249, %250 : vector<8x128xf32>
    %252 = math.tanh %251 : vector<8x128xf32>
    %253 = arith.mulf %248, %252 : vector<8x128xf32>
    %254 = arith.addf %223, %253 : vector<8x128xf32>
    %c8_i32 = arith.constant 8 : i32
    %c0_56 = arith.constant 0 : index
    %c0_57 = arith.constant 0 : index
    %255 = vector.load %arg7[%c0_56, %c0_57] : memref<8x128xf32, #tpu.memory_space<vmem>>, vector<8x128xf32>
    tpu.vector_store %arg7[%c0_56, %c0_57], %253 {strides = array<i32>} : memref<8x128xf32, #tpu.memory_space<vmem>>, vector<8x128xf32>,
    %c0_58 = arith.constant 0 : index
    %c0_59 = arith.constant 0 : index
    %256 = vector.load %arg8[%c0_58, %c0_59] : memref<8x128xf32, #tpu.memory_space<vmem>>, vector<8x128xf32>
    tpu.vector_store %arg8[%c0_58, %c0_59], %251 {strides = array<i32>} : memref<8x128xf32, #tpu.memory_space<vmem>>, vector<8x128xf32>,
    %c0_60 = arith.constant 0 : index
    %c0_61 = arith.constant 0 : index
    %257 = vector.load %arg9[%c0_60, %c0_61] : memref<8x128xf32, #tpu.memory_space<vmem>>, vector<8x128xf32>
    tpu.vector_store %arg9[%c0_60, %c0_61], %254 {strides = array<i32>} : memref<8x128xf32, #tpu.memory_space<vmem>>, vector<8x128xf32>,
    %c0_i32_62 = arith.constant 0 : i32
    %258 = arith.cmpi eq, %arg1, %c0_i32_62 : i32
    %259 = arith.extui %258 : i1 to i32
    %c0_i32_63 = arith.constant 0 : i32
    %260 = arith.cmpi ne, %259, %c0_i32_63 : i32
    scf.if %260 {
      %cst_64 = arith.constant 1.250000e-01 : f32
      %261 = vector.broadcast %cst_64 : f32 to vector<8x128xf32>
      %262 = arith.mulf %254, %261 : vector<8x128xf32>
      %c0_65 = arith.constant 0 : index
      %c0_66 = arith.constant 0 : index
      %263 = vector.load %arg4[%c0_65, %c0_66] : memref<128x128xf32, #tpu.memory_space<vmem>>, vector<128x128xf32>
      %cst_67 = arith.constant dense<0.000000e+00> : vector<8x128xf32>
      %264 = tpu.matmul %262, %263, %cst_67 {dimension_numbers = #tpu.dot_dimension_numbers<[1], [0], [0], [1], [0, 0, 1, 1], [], []>} : vector<8x128xf32>, vector<128x128xf32>, vector<8x128xf32> -> vector<8x128xf32>
      %c0_68 = arith.constant 0 : index
      %c0_69 = arith.constant 0 : index
      %265 = vector.load %arg5[%c0_68, %c0_69] : memref<1x128xf32, #tpu.memory_space<vmem>>, vector<1x128xf32>
      %266 = vector.broadcast %265 : vector<1x128xf32> to vector<8x128xf32>
      %267 = arith.addf %264, %266 : vector<8x128xf32>
      %c0_70 = arith.constant 0 : index
      %c0_71 = arith.constant 0 : index
      %268 = vector.load %arg6[%c0_70, %c0_71] : memref<8x128xf32, #tpu.memory_space<vmem>>, vector<8x128xf32>
      tpu.vector_store %arg6[%c0_70, %c0_71], %267 {strides = array<i32>} : memref<8x128xf32, #tpu.memory_space<vmem>>, vector<8x128xf32>,
    } else {
    }
    return
  }
  func.func @transform_0(%arg0: i32, %arg1: i32) -> (i32, i32, i32) {
    %c0_i32 = arith.constant 0 : i32
    %c0_i32_0 = arith.constant 0 : i32
    return %arg1, %arg0, %c0_i32 : i32, i32, i32
  }
  func.func @transform_1(%arg0: i32, %arg1: i32) -> (i32, i32) {
    %c0_i32 = arith.constant 0 : i32
    %c0_i32_0 = arith.constant 0 : i32
    %c0_i32_1 = arith.constant 0 : i32
    return %c0_i32, %c0_i32_0 : i32, i32
  }
  func.func @transform_2(%arg0: i32, %arg1: i32) -> (i32, i32) {
    %c0_i32 = arith.constant 0 : i32
    %c0_i32_0 = arith.constant 0 : i32
    %c0_i32_1 = arith.constant 0 : i32
    return %c0_i32, %c0_i32_0 : i32, i32
  }
  func.func @transform_3(%arg0: i32, %arg1: i32) -> (i32, i32) {
    %c0_i32 = arith.constant 0 : i32
    %c0_i32_0 = arith.constant 0 : i32
    %c0_i32_1 = arith.constant 0 : i32
    return %c0_i32, %c0_i32_0 : i32, i32
  }
  func.func @transform_4(%arg0: i32, %arg1: i32) -> (i32, i32) {
    %c0_i32 = arith.constant 0 : i32
    %c0_i32_0 = arith.constant 0 : i32
    return %arg0, %c0_i32 : i32, i32
  }
}

</mosaic_0001>

<llo_original>
// kernel: tpu_custom_call.1
$region0: #{tpu_custom_call.1}
  #allocation0 [shape = 'u32[]', space=smem, size = 0x4, offset = 0x4, fixed_abs, tag = 'smem constant byte address 0x4 - core index']
  #allocation1 [shape = 'u32[144,128]{1,0:T(1,128)}', space=vmem, size = 0x12000, scoped, tag = 'internal scratch']
  #allocation2 [shape = 'f32[8,128]{1,0:T(8,128)}', space=vmem, size = 0x1000, scoped, tag = 'scratch operand']
  #allocation3 [shape = 'f32[8,128]{1,0:T(8,128)}', space=vmem, size = 0x1000, scoped, tag = 'scratch operand']
  #allocation4 [shape = 'f32[8,128]{1,0:T(8,128)}', space=vmem, size = 0x1000, scoped, tag = 'scratch operand']
  %s0 = inlined_call_operand.hbm [shape: f32[8,8,512], index: 0, kind: input, shape index: {}]
  %s1 = inlined_call_operand.hbm [shape: f32[128,512], index: 1, kind: input, shape index: {}]
  %s2 = inlined_call_operand.hbm [shape: f32[128,128], index: 2, kind: input, shape index: {}]
  %s3 = inlined_call_operand.vmem [shape: f32[1,128], index: 3, kind: input, shape index: {}]
  %s4 = inlined_call_operand.hbm [shape: f32[8,128], index: 4, kind: output, shape index: {}]
  %s5 = sld [smem:[#allocation0]]
  $region46: #{tpu_custom_call.1} parent=0
    _
  %s7 = ssub.s32 1, %s5
  %s8 = scalar_select 0, %s7, %s5
  $region1: #{tpu_custom_call.1} parent=0
    #allocation5 [shape = 'u8[131072]{0}', space=vmem, size = 0x20000, scoped, tag = 'input window, operand 0, single buffered']
    #allocation6 [shape = 's32[1]{0}', space=sflag, size = 0x4, scoped, tag = 'scoped memory for tpu_custom_call.1']
    #allocation7 [shape = 's32[1]{0}', space=sflag, size = 0x4, scoped, tag = 'scoped memory for tpu_custom_call.1']
    #allocation8 [shape = 'u8[262144]{0}', space=vmem, size = 0x40000, scoped, tag = 'input window, operand 1, single buffered']
    #allocation9 [shape = 's32[1]{0}', space=sflag, size = 0x4, scoped, tag = 'scoped memory for tpu_custom_call.1']
    #allocation10 [shape = 'u8[65536]{0}', space=vmem, size = 0x10000, scoped, tag = 'input window, operand 2, single buffered']
    #allocation11 [shape = 'u8[4096]{0}', space=vmem, size = 0x1000, scoped, tag = 'output window, operand 0, single buffered']
    %9 = vsyncpa [#allocation6], 0
    %10 = vsyncpa [#allocation9], 0
    %11 = vsyncpa [#allocation7], 0
    // Predicated region
    $region2: #{tpu_custom_call.1} parent=1 // pred_check
      _
    $region3: #{tpu_custom_call.1} parent=1 // pred_check_branch
      %13 = sbr.rel (0) target = $region5
    $region4: #{tpu_custom_call.1} parent=1 // pred_region
      %s15 = ssub.s32 4096, 4096
      %16 = vsyncadd [#allocation6], %s15
      %s17 = sshll.u32 [#allocation5], 4
      %s18 = int_to_ptr.vmem [resolvable:$true] %s17
      %23 = dma.hbm_to_vmem [thread:$0]  %s0, 4096, %s18, [#allocation6], 512, 512, 32
    $region5: #{tpu_custom_call.1} parent=1 // pred_fallthru
      _
    // Predicated region
    $region6: #{tpu_custom_call.1} parent=1 // pred_check
      _
    $region7: #{tpu_custom_call.1} parent=1 // pred_check_branch
      %25 = sbr.rel (0) target = $region9
    $region8: #{tpu_custom_call.1} parent=1 // pred_region
      %s27 = ssub.s32 8192, 8192
      %28 = vsyncadd [#allocation9], %s27
      %s29 = sshll.u32 [#allocation8], 4
      %s30 = int_to_ptr.vmem [resolvable:$true] %s29
      %35 = dma.hbm_to_vmem [thread:$0]  %s1, 8192, %s30, [#allocation9], 512, 512, 32
    $region9: #{tpu_custom_call.1} parent=1 // pred_fallthru
      _
    // Predicated region
    $region10: #{tpu_custom_call.1} parent=1 // pred_check
      _
    $region11: #{tpu_custom_call.1} parent=1 // pred_check_branch
      %37 = sbr.rel (0) target = $region13
    $region12: #{tpu_custom_call.1} parent=1 // pred_region
      %s39 = ssub.s32 2048, 2048
      %40 = vsyncadd [#allocation9], %s39
      %s41 = sshll.u32 [#allocation10], 4
      %s42 = int_to_ptr.vmem [resolvable:$true] %s41
      %47 = dma.hbm_to_vmem [thread:$0]  %s2, 2048, %s42, [#allocation9], 128, 128, 8
    $region13: #{tpu_custom_call.1} parent=1 // pred_fallthru
      _
    // Predicated region
    $region14: #{tpu_custom_call.1} parent=1 // pred_check
      _
    $region15: #{tpu_custom_call.1} parent=1 // pred_check_branch
      %49 = sbr.rel (0) target = $region17
    $region16: #{tpu_custom_call.1} parent=1 // pred_region
      _
    $region17: #{tpu_custom_call.1} parent=1 // pred_fallthru
      _
    // Predicated region
    $region18: #{tpu_custom_call.1} parent=1 // pred_check
      _
    $region19: #{tpu_custom_call.1} parent=1 // pred_check_branch
      %51 = sbr.rel (0) target = $region21
    $region20: #{tpu_custom_call.1} parent=1 // pred_region
      %52 = dma.done [#allocation6], 4096
    $region21: #{tpu_custom_call.1} parent=1 // pred_fallthru
      _
    // Predicated region
    $region22: #{tpu_custom_call.1} parent=1 // pred_check
      _
    $region23: #{tpu_custom_call.1} parent=1 // pred_check_branch
      %54 = sbr.rel (0) target = $region25
    $region24: #{tpu_custom_call.1} parent=1 // pred_region
      %55 = dma.done [#allocation9], 8192
    $region25: #{tpu_custom_call.1} parent=1 // pred_fallthru
      _
    // Predicated region
    $region26: #{tpu_custom_call.1} parent=1 // pred_check
      _
    $region27: #{tpu_custom_call.1} parent=1 // pred_check_branch
      %57 = sbr.rel (0) target = $region29
    $region28: #{tpu_custom_call.1} parent=1 // pred_region
      %58 = dma.done [#allocation9], 2048
    $region29: #{tpu_custom_call.1} parent=1 // pred_fallthru
      _
    %p59 = scmp.eq.s32.totalorder 0, 0
    // Predicated region
    $region30: #{tpu_custom_call.1} parent=1 // pred_check
      %p60 = pneg %p59
    $region31: #{tpu_custom_call.1} parent=1 // pred_check_branch
      %62 = sbr.rel (%p60) target = $region33
    $region32: #{tpu_custom_call.1} parent=1 // pred_region
      %63 = vst [vmem:[#allocation2] sm:$0xff] 0.0
      %64 = vst [vmem:[#allocation3] sm:$0xff] 0.0
      %65 = vst [vmem:[#allocation4] sm:$0xff] 0.0
    $region33: #{tpu_custom_call.1} parent=1 // pred_fallthru
      _
    %v66 = vld [vmem:[#allocation8] sm:$0xff]
    %v67 = vld [vmem:[#allocation8 + $0x8] sm:$0xff]
    %v68 = vld [vmem:[#allocation8 + $0x10] sm:$0xff]
    %v69 = vld [vmem:[#allocation8 + $0x18] sm:$0xff]
    %v70 = vld [vmem:[#allocation8 + $0x20] sm:$0xff]
    %v71 = vld [vmem:[#allocation8 + $0x28] sm:$0xff]
    %v72 = vld [vmem:[#allocation8 + $0x30] sm:$0xff]
    %v73 = vld [vmem:[#allocation8 + $0x38] sm:$0xff]
    %v74 = vld [vmem:[#allocation8 + $0x40] sm:$0xff]
    %v75 = vld [vmem:[#allocation8 + $0x48] sm:$0xff]
    %v76 = vld [vmem:[#allocation8 + $0x50] sm:$0xff]
    %v77 = vld [vmem:[#allocation8 + $0x58] sm:$0xff]
    %v78 = vld [vmem:[#allocation8 + $0x60] sm:$0xff]
    %v79 = vld [vmem:[#allocation8 + $0x68] sm:$0xff]
    %v80 = vld [vmem:[#allocation8 + $0x70] sm:$0xff]
    %v81 = vld [vmem:[#allocation8 + $0x78] sm:$0xff]
    %v82 = vld [vmem:[#allocation8 + $0x80] sm:$0xff]
    %v83 = vld [vmem:[#allocation8 + $0x88] sm:$0xff]
    %v84 = vld [vmem:[#allocation8 + $0x90] sm:$0xff]
    %v85 = vld [vmem:[#allocation8 + $0x98] sm:$0xff]
    %v86 = vld [vmem:[#allocation8 + $0xa0] sm:$0xff]
    %v87 = vld [vmem:[#allocation8 + $0xa8] sm:$0xff]
    %v88 = vld [vmem:[#allocation8 + $0xb0] sm:$0xff]
    %v89 = vld [vmem:[#allocation8 + $0xb8] sm:$0xff]
    %v90 = vld [vmem:[#allocation8 + $0xc0] sm:$0xff]
    %v91 = vld [vmem:[#allocation8 + $0xc8] sm:$0xff]
    %v92 = vld [vmem:[#allocation8 + $0xd0] sm:$0xff]
    %v93 = vld [vmem:[#allocation8 + $0xd8] sm:$0xff]
    %v94 = vld [vmem:[#allocation8 + $0xe0] sm:$0xff]
    %v95 = vld [vmem:[#allocation8 + $0xe8] sm:$0xff]
    %v96 = vld [vmem:[#allocation8 + $0xf0] sm:$0xff]
    %v97 = vld [vmem:[#allocation8 + $0xf8] sm:$0xff]
    %v98 = vld [vmem:[#allocation8 + $0x100] sm:$0xff]
    %v99 = vld [vmem:[#allocation8 + $0x108] sm:$0xff]
    %v100 = vld [vmem:[#allocation8 + $0x110] sm:$0xff]
    %v101 = vld [vmem:[#allocation8 + $0x118] sm:$0xff]
    %v102 = vld [vmem:[#allocation8 + $0x120] sm:$0xff]
    %v103 = vld [vmem:[#allocation8 + $0x128] sm:$0xff]
    %v104 = vld [vmem:[#allocation8 + $0x130] sm:$0xff]
    %v105 = vld [vmem:[#allocation8 + $0x138] sm:$0xff]
    %v106 = vld [vmem:[#allocation8 + $0x140] sm:$0xff]
    %v107 = vld [vmem:[#allocation8 + $0x148] sm:$0xff]
    %v108 = vld [vmem:[#allocation8 + $0x150] sm:$0xff]
    %v109 = vld [vmem:[#allocation8 + $0x158] sm:$0xff]
    %v110 = vld [vmem:[#allocation8 + $0x160] sm:$0xff]
    %v111 = vld [vmem:[#allocation8 + $0x168] sm:$0xff]
    %v112 = vld [vmem:[#allocation8 + $0x170] sm:$0xff]
    %v113 = vld [vmem:[#allocation8 + $0x178] sm:$0xff]
    %v114 = vld [vmem:[#allocation8 + $0x180] sm:$0xff]
    %v115 = vld [vmem:[#allocation8 + $0x188] sm:$0xff]
    %v116 = vld [vmem:[#allocation8 + $0x190] sm:$0xff]
    %v117 = vld [vmem:[#allocation8 + $0x198] sm:$0xff]
    %v118 = vld [vmem:[#allocation8 + $0x1a0] sm:$0xff]
    %v119 = vld [vmem:[#allocation8 + $0x1a8] sm:$0xff]
    %v120 = vld [vmem:[#allocation8 + $0x1b0] sm:$0xff]
    %v121 = vld [vmem:[#allocation8 + $0x1b8] sm:$0xff]
    %v122 = vld [vmem:[#allocation8 + $0x1c0] sm:$0xff]
    %v123 = vld [vmem:[#allocation8 + $0x1c8] sm:$0xff]
    %v124 = vld [vmem:[#allocation8 + $0x1d0] sm:$0xff]
    %v125 = vld [vmem:[#allocation8 + $0x1d8] sm:$0xff]
    %v126 = vld [vmem:[#allocation8 + $0x1e0] sm:$0xff]
    %v127 = vld [vmem:[#allocation8 + $0x1e8] sm:$0xff]
    %v128 = vld [vmem:[#allocation8 + $0x1f0] sm:$0xff]
    %v129 = vld [vmem:[#allocation8 + $0x1f8] sm:$0xff]
    %v130 = vld [vmem:[#allocation2] sm:$0xff]
    %v131 = vld [vmem:[#allocation3] sm:$0xff]
    %v132 = vld [vmem:[#allocation4] sm:$0xff]
    %v133 = vld [vmem:[#allocation5] sm:$0xff]
    %v134 = vld [vmem:[#allocation5 + $0x8] sm:$0xff]
    %v135 = vld [vmem:[#allocation5 + $0x10] sm:$0xff]
    %v136 = vld [vmem:[#allocation5 + $0x18] sm:$0xff]
    %137 = vmatprep.subr.mxu0 %v67
    %138 = vmatpush1.msra.mxu0 %v66
    %139 = vmatprep.subr.mxu0 %v71
    %140 = vmatpush1.msra.mxu0 %v70
    %141 = vmatprep.subr.mxu0 %v75
    %142 = vmatpush1.msra.mxu0 %v74
    %143 = vmatprep.subr.mxu0 %v79
    %144 = vmatpush1.msra.mxu0 %v78
    %145 = vmatprep.subr.mxu0 %v83
    %146 = vmatpush1.msra.mxu0 %v82
    %147 = vmatprep.subr.mxu0 %v87
    %148 = vmatpush1.msra.mxu0 %v86
    %149 = vmatprep.subr.mxu0 %v91
    %150 = vmatpush1.msra.mxu0 %v90
    %151 = vmatprep.subr.mxu0 %v95
    %152 = vmatpush1.msra.mxu0 %v94
    %153 = vmatprep.subr.mxu0 %v99
    %154 = vmatpush1.msra.mxu0 %v98
    %155 = vmatprep.subr.mxu0 %v103
    %156 = vmatpush1.msra.mxu0 %v102
    %157 = vmatprep.subr.mxu0 %v107
    %158 = vmatpush1.msra.mxu0 %v106
    %159 = vmatprep.subr.mxu0 %v111
    %160 = vmatpush1.msra.mxu0 %v110
    %161 = vmatprep.subr.mxu0 %v115
    %162 = vmatpush1.msra.mxu0 %v114
    %163 = vmatprep.subr.mxu0 %v119
    %164 = vmatpush1.msra.mxu0 %v118
    %165 = vmatprep.subr.mxu0 %v123
    %166 = vmatpush1.msra.mxu0 %v122
    %167 = vmatprep.subr.mxu0 %v127
    %168 = vmatpush1.msra.mxu0 %v126
    %169 = vmatprep.subr.mxu0 0.0
    %170 = vmatpush1.msra.mxu0 0.0
    %171 = vmatprep.subr.mxu0 0.0
    %172 = vmatpush1.msra.mxu0 0.0
    %173 = vmatprep.subr.mxu0 0.0
    %174 = vmatpush1.msra.mxu0 0.0
    %175 = vmatprep.subr.mxu0 0.0
    %176 = vmatpush1.msra.mxu0 0.0
    %177 = vmatprep.subr.mxu0 0.0
    %178 = vmatpush1.msra.mxu0 0.0
    %179 = vmatprep.subr.mxu0 0.0
    %180 = vmatpush1.msra.mxu0 0.0
    %181 = vmatprep.subr.mxu0 0.0
    %182 = vmatpush1.msra.mxu0 0.0
    %183 = vmatprep.subr.mxu0 0.0
    %184 = vmatpush1.msra.mxu0 0.0
    %185 = vmatprep.subr.mxu0 0.0
    %186 = vmatpush1.msra.mxu0 0.0
    %187 = vmatprep.subr.mxu0 0.0
    %188 = vmatpush1.msra.mxu0 0.0
    %189 = vmatprep.subr.mxu0 0.0
    %190 = vmatpush1.msra.mxu0 0.0
    %191 = vmatprep.subr.mxu0 0.0
    %192 = vmatpush1.msra.mxu0 0.0
    %193 = vmatprep.subr.mxu0 0.0
    %194 = vmatpush1.msra.mxu0 0.0
    %195 = vmatprep.subr.mxu0 0.0
    %196 = vmatpush1.msra.mxu0 0.0
    %197 = vmatprep.subr.mxu0 0.0
    %198 = vmatpush1.msra.mxu0 0.0
    %199 = vmatprep.subr.mxu0 0.0
    %200 = vmatpush1.msra.mxu0 0.0
    %201 = vmatprep.mubr.f32.mxu0 0.0
    %202 = vmatmul.mubr.f32.gmra.mrb[0].mxu0 %v130
    %v203 = vpop.f32.mrb[0].mxu0
    %v204 = vadd.f32 0.0, %v203
    %v205 = vpop.f32.mrb[0].mxu0
    %v206 = vadd.f32 0.0, %v205
    %207 = vdwg.mxu0
    %208 = vmatprep.subr.mxu0 %v69
    %209 = vmatpush1.msra.mxu0 %v68
    %210 = vmatprep.subr.mxu0 %v73
    %211 = vmatpush1.msra.mxu0 %v72
    %212 = vmatprep.subr.mxu0 %v77
    %213 = vmatpush1.msra.mxu0 %v76
    %214 = vmatprep.subr.mxu0 %v81
    %215 = vmatpush1.msra.mxu0 %v80
    %216 = vmatprep.subr.mxu0 %v85
    %217 = vmatpush1.msra.mxu0 %v84
    %218 = vmatprep.subr.mxu0 %v89
    %219 = vmatpush1.msra.mxu0 %v88
    %220 = vmatprep.subr.mxu0 %v93
    %221 = vmatpush1.msra.mxu0 %v92
    %222 = vmatprep.subr.mxu0 %v97
    %223 = vmatpush1.msra.mxu0 %v96
    %224 = vmatprep.subr.mxu0 %v101
    %225 = vmatpush1.msra.mxu0 %v100
    %226 = vmatprep.subr.mxu0 %v105
    %227 = vmatpush1.msra.mxu0 %v104
    %228 = vmatprep.subr.mxu0 %v109
    %229 = vmatpush1.msra.mxu0 %v108
    %230 = vmatprep.subr.mxu0 %v113
    %231 = vmatpush1.msra.mxu0 %v112
    %232 = vmatprep.subr.mxu0 %v117
    %233 = vmatpush1.msra.mxu0 %v116
    %234 = vmatprep.subr.mxu0 %v121
    %235 = vmatpush1.msra.mxu0 %v120
    %236 = vmatprep.subr.mxu0 %v125
    %237 = vmatpush1.msra.mxu0 %v124
    %238 = vmatprep.subr.mxu0 %v129
    %239 = vmatpush1.msra.mxu0 %v128
    %240 = vmatprep.subr.mxu0 0.0
    %241 = vmatpush1.msra.mxu0 0.0
    %242 = vmatprep.subr.mxu0 0.0
    %243 = vmatpush1.msra.mxu0 0.0
    %244 = vmatprep.subr.mxu0 0.0
    %245 = vmatpush1.msra.mxu0 0.0
    %246 = vmatprep.subr.mxu0 0.0
    %247 = vmatpush1.msra.mxu0 0.0
    %248 = vmatprep.subr.mxu0 0.0
    %249 = vmatpush1.msra.mxu0 0.0
    %250 = vmatprep.subr.mxu0 0.0
    %251 = vmatpush1.msra.mxu0 0.0
    %252 = vmatprep.subr.mxu0 0.0
    %253 = vmatpush1.msra.mxu0 0.0
    %254 = vmatprep.subr.mxu0 0.0
    %255 = vmatpush1.msra.mxu0 0.0
    %256 = vmatprep.subr.mxu0 0.0
    %257 = vmatpush1.msra.mxu0 0.0
    %258 = vmatprep.subr.mxu0 0.0
    %259 = vmatpush1.msra.mxu0 0.0
    %260 = vmatprep.subr.mxu0 0.0
    %261 = vmatpush1.msra.mxu0 0.0
    %262 = vmatprep.subr.mxu0 0.0
    %263 = vmatpush1.msra.mxu0 0.0
    %264 = vmatprep.subr.mxu0 0.0
    %265 = vmatpush1.msra.mxu0 0.0
    %266 = vmatprep.subr.mxu0 0.0
    %267 = vmatpush1.msra.mxu0 0.0
    %268 = vmatprep.subr.mxu0 0.0
    %269 = vmatpush1.msra.mxu0 0.0
    %270 = vmatprep.subr.mxu0 0.0
    %271 = vmatpush1.msra.mxu0 0.0
    %272 = vmatprep.mubr.f32.mxu0 0.0
    %273 = vmatmul.mubr.f32.gmra.mrb[0].mxu0 %v130
    %v274 = vpop.f32.mrb[0].mxu0
    %v275 = vadd.f32 0.0, %v274
    %v276 = vpop.f32.mrb[0].mxu0
    %v277 = vadd.f32 0.0, %v276
    %278 = vdwg.mxu0
    %v279 = vadd.f32 %v133, %v204
    %v280 = vadd.f32 %v134, %v206
    %v281 = vadd.f32 %v135, %v275
    %v282 = vadd.f32 %v136, %v277
    %v283 = vxor.u32 %v279, 2147483648
    %v284 = vmul.f32 %v283, 1.442695
    %v285 = vpow.pop %v284
    %v286 = vadd.f32 %v285, 1.0
    %v287 = vrcp.pop %v286
    %v288 = vmul.f32 1.0, %v287
    %v289 = vxor.u32 %v280, 2147483648
    %v290 = vmul.f32 %v289, 1.442695
    %v291 = vpow.pop %v290
    %v292 = vadd.f32 %v291, 1.0
    %v293 = vrcp.pop %v292
    %v294 = vmul.f32 1.0, %v293
    %v295 = vtanh.pop %v281
    %v296 = vxor.u32 %v282, 2147483648
    %v297 = vmul.f32 %v296, 1.442695
    %v298 = vpow.pop %v297
    %v299 = vadd.f32 %v298, 1.0
    %v300 = vrcp.pop %v299
    %v301 = vmul.f32 1.0, %v300
    %v302 = vmul.f32 %v294, %v131
    %v303 = vmul.f32 %v288, %v295
    %v304 = vadd.f32 %v302, %v303
    %v305 = vtanh.pop %v304
    %v306 = vmul.f32 %v301, %v305
    %v307 = vadd.f32 %v132, %v306
    %s308 = scalar_lea.vmem [#allocation5], 32
    %v309 = vld [vmem:[%s308] sm:$0xff]
    %v310 = vld [vmem:[%s308 + $0x8] sm:$0xff]
    %v311 = vld [vmem:[%s308 + $0x10] sm:$0xff]
    %v312 = vld [vmem:[%s308 + $0x18] sm:$0xff]
    %313 = vmatprep.subr.mxu0 %v67
    %314 = vmatpush1.msra.mxu0 %v66
    %315 = vmatprep.subr.mxu0 %v71
    %316 = vmatpush1.msra.mxu0 %v70
    %317 = vmatprep.subr.mxu0 %v75
    %318 = vmatpush1.msra.mxu0 %v74
    %319 = vmatprep.subr.mxu0 %v79
    %320 = vmatpush1.msra.mxu0 %v78
    %321 = vmatprep.subr.mxu0 %v83
    %322 = vmatpush1.msra.mxu0 %v82
    %323 = vmatprep.subr.mxu0 %v87
    %324 = vmatpush1.msra.mxu0 %v86
    %325 = vmatprep.subr.mxu0 %v91
    %326 = vmatpush1.msra.mxu0 %v90
    %327 = vmatprep.subr.mxu0 %v95
    %328 = vmatpush1.msra.mxu0 %v94
    %329 = vmatprep.subr.mxu0 %v99
    %330 = vmatpush1.msra.mxu0 %v98
    %331 = vmatprep.subr.mxu0 %v103
    %332 = vmatpush1.msra.mxu0 %v102
    %333 = vmatprep.subr.mxu0 %v107
    %334 = vmatpush1.msra.mxu0 %v106
    %335 = vmatprep.subr.mxu0 %v111
    %336 = vmatpush1.msra.mxu0 %v110
    %337 = vmatprep.subr.mxu0 %v115
    %338 = vmatpush1.msra.mxu0 %v114
    %339 = vmatprep.subr.mxu0 %v119
    %340 = vmatpush1.msra.mxu0 %v118
    %341 = vmatprep.subr.mxu0 %v123
    %342 = vmatpush1.msra.mxu0 %v122
    %343 = vmatprep.subr.mxu0 %v127
    %344 = vmatpush1.msra.mxu0 %v126
    %345 = vmatprep.subr.mxu0 0.0
    %346 = vmatpush1.msra.mxu0 0.0
    %347 = vmatprep.subr.mxu0 0.0
    %348 = vmatpush1.msra.mxu0 0.0
    %349 = vmatprep.subr.mxu0 0.0
    %350 = vmatpush1.msra.mxu0 0.0
    %351 = vmatprep.subr.mxu0 0.0
    %352 = vmatpush1.msra.mxu0 0.0
    %353 = vmatprep.subr.mxu0 0.0
    %354 = vmatpush1.msra.mxu0 0.0
    %355 = vmatprep.subr.mxu0 0.0
    %356 = vmatpush1.msra.mxu0 0.0
    %357 = vmatprep.subr.mxu0 0.0
    %358 = vmatpush1.msra.mxu0 0.0
    %359 = vmatprep.subr.mxu0 0.0
    %360 = vmatpush1.msra.mxu0 0.0
    %361 = vmatprep.subr.mxu0 0.0
    %362 = vmatpush1.msra.mxu0 0.0
    %363 = vmatprep.subr.mxu0 0.0
    %364 = vmatpush1.msra.mxu0 0.0
    %365 = vmatprep.subr.mxu0 0.0
    %366 = vmatpush1.msra.mxu0 0.0
    %367 = vmatprep.subr.mxu0 0.0
    %368 = vmatpush1.msra.mxu0 0.0
    %369 = vmatprep.subr.mxu0 0.0
    %370 = vmatpush1.msra.mxu0 0.0
    %371 = vmatprep.subr.mxu0 0.0
    %372 = vmatpush1.msra.mxu0 0.0
    %373 = vmatprep.subr.mxu0 0.0
    %374 = vmatpush1.msra.mxu0 0.0
    %375 = vmatprep.subr.mxu0 0.0
    %376 = vmatpush1.msra.mxu0 0.0
    %377 = vmatprep.mubr.f32.mxu0 0.0
    %378 = vmatmul.mubr.f32.gmra.mrb[0].mxu0 %v306
    %v379 = vpop.f32.mrb[0].mxu0
    %v380 = vadd.f32 0.0, %v379
    %v381 = vpop.f32.mrb[0].mxu0
    %v382 = vadd.f32 0.0, %v381
    %383 = vdwg.mxu0
    %384 = vmatprep.subr.mxu0 %v69
    %385 = vmatpush1.msra.mxu0 %v68
    %386 = vmatprep.subr.mxu0 %v73
    %387 = vmatpush1.msra.mxu0 %v72
    %388 = vmatprep.subr.mxu0 %v77
    %389 = vmatpush1.msra.mxu0 %v76
    %390 = vmatprep.subr.mxu0 %v81
    %391 = vmatpush1.msra.mxu0 %v80
    %392 = vmatprep.subr.mxu0 %v85
    %393 = vmatpush1.msra.mxu0 %v84
    %394 = vmatprep.subr.mxu0 %v89
    %395 = vmatpush1.msra.mxu0 %v88
    %396 = vmatprep.subr.mxu0 %v93
    %397 = vmatpush1.msra.mxu0 %v92
    %398 = vmatprep.subr.mxu0 %v97
    %399 = vmatpush1.msra.mxu0 %v96
    %400 = vmatprep.subr.mxu0 %v101
    %401 = vmatpush1.msra.mxu0 %v100
    %402 = vmatprep.subr.mxu0 %v105
    %403 = vmatpush1.msra.mxu0 %v104
    %404 = vmatprep.subr.mxu0 %v109
    %405 = vmatpush1.msra.mxu0 %v108
    %406 = vmatprep.subr.mxu0 %v113
    %407 = vmatpush1.msra.mxu0 %v112
    %408 = vmatprep.subr.mxu0 %v117
    %409 = vmatpush1.msra.mxu0 %v116
    %410 = vmatprep.subr.mxu0 %v121
    %411 = vmatpush1.msra.mxu0 %v120
    %412 = vmatprep.subr.mxu0 %v125
    %413 = vmatpush1.msra.mxu0 %v124
    %414 = vmatprep.subr.mxu0 %v129
    %415 = vmatpush1.msra.mxu0 %v128
    %416 = vmatprep.subr.mxu0 0.0
    %417 = vmatpush1.msra.mxu0 0.0
    %418 = vmatprep.subr.mxu0 0.0
    %419 = vmatpush1.msra.mxu0 0.0
    %420 = vmatprep.subr.mxu0 0.0
    %421 = vmatpush1.msra.mxu0 0.0
    %422 = vmatprep.subr.mxu0 0.0
    %423 = vmatpush1.msra.mxu0 0.0
    %424 = vmatprep.subr.mxu0 0.0
    %425 = vmatpush1.msra.mxu0 0.0
    %426 = vmatprep.subr.mxu0 0.0
    %427 = vmatpush1.msra.mxu0 0.0
    %428 = vmatprep.subr.mxu0 0.0
    %429 = vmatpush1.msra.mxu0 0.0
    %430 = vmatprep.subr.mxu0 0.0
    %431 = vmatpush1.msra.mxu0 0.0
    %432 = vmatprep.subr.mxu0 0.0
    %433 = vmatpush1.msra.mxu0 0.0
    %434 = vmatprep.subr.mxu0 0.0
    %435 = vmatpush1.msra.mxu0 0.0
    %436 = vmatprep.subr.mxu0 0.0
    %437 = vmatpush1.msra.mxu0 0.0
    %438 = vmatprep.subr.mxu0 0.0
    %439 = vmatpush1.msra.mxu0 0.0
    %440 = vmatprep.subr.mxu0 0.0
    %441 = vmatpush1.msra.mxu0 0.0
    %442 = vmatprep.subr.mxu0 0.0
    %443 = vmatpush1.msra.mxu0 0.0
    %444 = vmatprep.subr.mxu0 0.0
    %445 = vmatpush1.msra.mxu0 0.0
    %446 = vmatprep.subr.mxu0 0.0
    %447 = vmatpush1.msra.mxu0 0.0
    %448 = vmatprep.mubr.f32.mxu0 0.0
    %449 = vmatmul.mubr.f32.gmra.mrb[0].mxu0 %v306
    %v450 = vpop.f32.mrb[0].mxu0
    %v451 = vadd.f32 0.0, %v450
    %v452 = vpop.f32.mrb[0].mxu0
    %v453 = vadd.f32 0.0, %v452
    %454 = vdwg.mxu0
    %v455 = vadd.f32 %v309, %v380
    %v456 = vadd.f32 %v310, %v382
    %v457 = vadd.f32 %v311, %v451
    %v458 = vadd.f32 %v312, %v453
    %v459 = vxor.u32 %v455, 2147483648
    %v460 = vmul.f32 %v459, 1.442695
    %v461 = vpow.pop %v460
    %v462 = vadd.f32 %v461, 1.0
    %v463 = vrcp.pop %v462
    %v464 = vmul.f32 1.0, %v463
    %v465 = vxor.u32 %v456, 2147483648
    %v466 = vmul.f32 %v465, 1.442695
    %v467 = vpow.pop %v466
    %v468 = vadd.f32 %v467, 1.0
    %v469 = vrcp.pop %v468
    %v470 = vmul.f32 1.0, %v469
    %v471 = vtanh.pop %v457
    %v472 = vxor.u32 %v458, 2147483648
    %v473 = vmul.f32 %v472, 1.442695
    %v474 = vpow.pop %v473
    %v475 = vadd.f32 %v474, 1.0
    %v476 = vrcp.pop %v475
    %v477 = vmul.f32 1.0, %v476
    %v478 = vmul.f32 %v470, %v304
    %v479 = vmul.f32 %v464, %v471
    %v480 = vadd.f32 %v478, %v479
    %v481 = vtanh.pop %v480
    %v482 = vmul.f32 %v477, %v481
    %v483 = vadd.f32 %v307, %v482
    %s484 = scalar_lea.vmem [#allocation5], 64
    %v485 = vld [vmem:[%s484] sm:$0xff]
    %v486 = vld [vmem:[%s484 + $0x8] sm:$0xff]
    %v487 = vld [vmem:[%s484 + $0x10] sm:$0xff]
    %v488 = vld [vmem:[%s484 + $0x18] sm:$0xff]
    %489 = vmatprep.subr.mxu0 %v67
    %490 = vmatpush1.msra.mxu0 %v66
    %491 = vmatprep.subr.mxu0 %v71
    %492 = vmatpush1.msra.mxu0 %v70
    %493 = vmatprep.subr.mxu0 %v75
    %494 = vmatpush1.msra.mxu0 %v74
    %495 = vmatprep.subr.mxu0 %v79
    %496 = vmatpush1.msra.mxu0 %v78
    %497 = vmatprep.subr.mxu0 %v83
    %498 = vmatpush1.msra.mxu0 %v82
    %499 = vmatprep.subr.mxu0 %v87
    %500 = vmatpush1.msra.mxu0 %v86
    %501 = vmatprep.subr.mxu0 %v91
    %502 = vmatpush1.msra.mxu0 %v90
    %503 = vmatprep.subr.mxu0 %v95
    %504 = vmatpush1.msra.mxu0 %v94
    %505 = vmatprep.subr.mxu0 %v99
    %506 = vmatpush1.msra.mxu0 %v98
    %507 = vmatprep.subr.mxu0 %v103
    %508 = vmatpush1.msra.mxu0 %v102
    %509 = vmatprep.subr.mxu0 %v107
    %510 = vmatpush1.msra.mxu0 %v106
    %511 = vmatprep.subr.mxu0 %v111
    %512 = vmatpush1.msra.mxu0 %v110
    %513 = vmatprep.subr.mxu0 %v115
    %514 = vmatpush1.msra.mxu0 %v114
    %515 = vmatprep.subr.mxu0 %v119
    %516 = vmatpush1.msra.mxu0 %v118
    %517 = vmatprep.subr.mxu0 %v123
    %518 = vmatpush1.msra.mxu0 %v122
    %519 = vmatprep.subr.mxu0 %v127
    %520 = vmatpush1.msra.mxu0 %v126
    %521 = vmatprep.subr.mxu0 0.0
    %522 = vmatpush1.msra.mxu0 0.0
    %523 = vmatprep.subr.mxu0 0.0
    %524 = vmatpush1.msra.mxu0 0.0
    %525 = vmatprep.subr.mxu0 0.0
    %526 = vmatpush1.msra.mxu0 0.0
    %527 = vmatprep.subr.mxu0 0.0
    %528 = vmatpush1.msra.mxu0 0.0
    %529 = vmatprep.subr.mxu0 0.0
    %530 = vmatpush1.msra.mxu0 0.0
    %531 = vmatprep.subr.mxu0 0.0
    %532 = vmatpush1.msra.mxu0 0.0
    %533 = vmatprep.subr.mxu0 0.0
    %534 = vmatpush1.msra.mxu0 0.0
    %535 = vmatprep.subr.mxu0 0.0
    %536 = vmatpush1.msra.mxu0 0.0
    %537 = vmatprep.subr.mxu0 0.0
    %538 = vmatpush1.msra.mxu0 0.0
    %539 = vmatprep.subr.mxu0 0.0
    %540 = vmatpush1.msra.mxu0 0.0
    %541 = vmatprep.subr.mxu0 0.0
    %542 = vmatpush1.msra.mxu0 0.0
    %543 = vmatprep.subr.mxu0 0.0
    %544 = vmatpush1.msra.mxu0 0.0
    %545 = vmatprep.subr.mxu0 0.0
    %546 = vmatpush1.msra.mxu0 0.0
    %547 = vmatprep.subr.mxu0 0.0
    %548 = vmatpush1.msra.mxu0 0.0
    %549 = vmatprep.subr.mxu0 0.0
    %550 = vmatpush1.msra.mxu0 0.0
    %551 = vmatprep.subr.mxu0 0.0
    %552 = vmatpush1.msra.mxu0 0.0
    %553 = vmatprep.mubr.f32.mxu0 0.0
    %554 = vmatmul.mubr.f32.gmra.mrb[0].mxu0 %v482
    %v555 = vpop.f32.mrb[0].mxu0
    %v556 = vadd.f32 0.0, %v555
    %v557 = vpop.f32.mrb[0].mxu0
    %v558 = vadd.f32 0.0, %v557
    %559 = vdwg.mxu0
    %560 = vmatprep.subr.mxu0 %v69
    %561 = vmatpush1.msra.mxu0 %v68
    %562 = vmatprep.subr.mxu0 %v73
    %563 = vmatpush1.msra.mxu0 %v72
    %564 = vmatprep.subr.mxu0 %v77
    %565 = vmatpush1.msra.mxu0 %v76
    %566 = vmatprep.subr.mxu0 %v81
    %567 = vmatpush1.msra.mxu0 %v80
    %568 = vmatprep.subr.mxu0 %v85
    %569 = vmatpush1.msra.mxu0 %v84
    %570 = vmatprep.subr.mxu0 %v89
    %571 = vmatpush1.msra.mxu0 %v88
    %572 = vmatprep.subr.mxu0 %v93
    %573 = vmatpush1.msra.mxu0 %v92
    %574 = vmatprep.subr.mxu0 %v97
    %575 = vmatpush1.msra.mxu0 %v96
    %576 = vmatprep.subr.mxu0 %v101
    %577 = vmatpush1.msra.mxu0 %v100
    %578 = vmatprep.subr.mxu0 %v105
    %579 = vmatpush1.msra.mxu0 %v104
    %580 = vmatprep.subr.mxu0 %v109
    %581 = vmatpush1.msra.mxu0 %v108
    %582 = vmatprep.subr.mxu0 %v113
    %583 = vmatpush1.msra.mxu0 %v112
    %584 = vmatprep.subr.mxu0 %v117
    %585 = vmatpush1.msra.mxu0 %v116
    %586 = vmatprep.subr.mxu0 %v121
    %587 = vmatpush1.msra.mxu0 %v120
    %588 = vmatprep.subr.mxu0 %v125
    %589 = vmatpush1.msra.mxu0 %v124
    %590 = vmatprep.subr.mxu0 %v129
    %591 = vmatpush1.msra.mxu0 %v128
    %592 = vmatprep.subr.mxu0 0.0
    %593 = vmatpush1.msra.mxu0 0.0
    %594 = vmatprep.subr.mxu0 0.0
    %595 = vmatpush1.msra.mxu0 0.0
    %596 = vmatprep.subr.mxu0 0.0
    %597 = vmatpush1.msra.mxu0 0.0
    %598 = vmatprep.subr.mxu0 0.0
    %599 = vmatpush1.msra.mxu0 0.0
    %600 = vmatprep.subr.mxu0 0.0
    %601 = vmatpush1.msra.mxu0 0.0
    %602 = vmatprep.subr.mxu0 0.0
    %603 = vmatpush1.msra.mxu0 0.0
    %604 = vmatprep.subr.mxu0 0.0
    %605 = vmatpush1.msra.mxu0 0.0
    %606 = vmatprep.subr.mxu0 0.0
    %607 = vmatpush1.msra.mxu0 0.0
    %608 = vmatprep.subr.mxu0 0.0
    %609 = vmatpush1.msra.mxu0 0.0
    %610 = vmatprep.subr.mxu0 0.0
    %611 = vmatpush1.msra.mxu0 0.0
    %612 = vmatprep.subr.mxu0 0.0
    %613 = vmatpush1.msra.mxu0 0.0
    %614 = vmatprep.subr.mxu0 0.0
    %615 = vmatpush1.msra.mxu0 0.0
    %616 = vmatprep.subr.mxu0 0.0
    %617 = vmatpush1.msra.mxu0 0.0
    %618 = vmatprep.subr.mxu0 0.0
    %619 = vmatpush1.msra.mxu0 0.0
    %620 = vmatprep.subr.mxu0 0.0
    %621 = vmatpush1.msra.mxu0 0.0
    %622 = vmatprep.subr.mxu0 0.0
    %623 = vmatpush1.msra.mxu0 0.0
    %624 = vmatprep.mubr.f32.mxu0 0.0
    %625 = vmatmul.mubr.f32.gmra.mrb[0].mxu0 %v482
    %v626 = vpop.f32.mrb[0].mxu0
    %v627 = vadd.f32 0.0, %v626
    %v628 = vpop.f32.mrb[0].mxu0
    %v629 = vadd.f32 0.0, %v628
    %630 = vdwg.mxu0
    %v631 = vadd.f32 %v485, %v556
    %v632 = vadd.f32 %v486, %v558
    %v633 = vadd.f32 %v487, %v627
    %v634 = vadd.f32 %v488, %v629
    %v635 = vxor.u32 %v631, 2147483648
    %v636 = vmul.f32 %v635, 1.442695
    %v637 = vpow.pop %v636
    %v638 = vadd.f32 %v637, 1.0
    %v639 = vrcp.pop %v638
    %v640 = vmul.f32 1.0, %v639
    %v641 = vxor.u32 %v632, 2147483648
    %v642 = vmul.f32 %v641, 1.442695
    %v643 = vpow.pop %v642
    %v644 = vadd.f32 %v643, 1.0
    %v645 = vrcp.pop %v644
    %v646 = vmul.f32 1.0, %v645
    %v647 = vtanh.pop %v633
    %v648 = vxor.u32 %v634, 2147483648
    %v649 = vmul.f32 %v648, 1.442695
    %v650 = vpow.pop %v649
    %v651 = vadd.f32 %v650, 1.0
    %v652 = vrcp.pop %v651
    %v653 = vmul.f32 1.0, %v652
    %v654 = vmul.f32 %v646, %v480
    %v655 = vmul.f32 %v640, %v647
    %v656 = vadd.f32 %v654, %v655
    %v657 = vtanh.pop %v656
    %v658 = vmul.f32 %v653, %v657
    %v659 = vadd.f32 %v483, %v658
    %s660 = scalar_lea.vmem [#allocation5], 96
    %v661 = vld [vmem:[%s660] sm:$0xff]
    %v662 = vld [vmem:[%s660 + $0x8] sm:$0xff]
    %v663 = vld [vmem:[%s660 + $0x10] sm:$0xff]
    %v664 = vld [vmem:[%s660 + $0x18] sm:$0xff]
    %665 = vmatprep.subr.mxu0 %v67
    %666 = vmatpush1.msra.mxu0 %v66
    %667 = vmatprep.subr.mxu0 %v71
    %668 = vmatpush1.msra.mxu0 %v70
    %669 = vmatprep.subr.mxu0 %v75
    %670 = vmatpush1.msra.mxu0 %v74
    %671 = vmatprep.subr.mxu0 %v79
    %672 = vmatpush1.msra.mxu0 %v78
    %673 = vmatprep.subr.mxu0 %v83
    %674 = vmatpush1.msra.mxu0 %v82
    %675 = vmatprep.subr.mxu0 %v87
    %676 = vmatpush1.msra.mxu0 %v86
    %677 = vmatprep.subr.mxu0 %v91
    %678 = vmatpush1.msra.mxu0 %v90
    %679 = vmatprep.subr.mxu0 %v95
    %680 = vmatpush1.msra.mxu0 %v94
    %681 = vmatprep.subr.mxu0 %v99
    %682 = vmatpush1.msra.mxu0 %v98
    %683 = vmatprep.subr.mxu0 %v103
    %684 = vmatpush1.msra.mxu0 %v102
    %685 = vmatprep.subr.mxu0 %v107
    %686 = vmatpush1.msra.mxu0 %v106
    %687 = vmatprep.subr.mxu0 %v111
    %688 = vmatpush1.msra.mxu0 %v110
    %689 = vmatprep.subr.mxu0 %v115
    %690 = vmatpush1.msra.mxu0 %v114
    %691 = vmatprep.subr.mxu0 %v119
    %692 = vmatpush1.msra.mxu0 %v118
    %693 = vmatprep.subr.mxu0 %v123
    %694 = vmatpush1.msra.mxu0 %v122
    %695 = vmatprep.subr.mxu0 %v127
    %696 = vmatpush1.msra.mxu0 %v126
    %697 = vmatprep.subr.mxu0 0.0
    %698 = vmatpush1.msra.mxu0 0.0
    %699 = vmatprep.subr.mxu0 0.0
    %700 = vmatpush1.msra.mxu0 0.0
    %701 = vmatprep.subr.mxu0 0.0
    %702 = vmatpush1.msra.mxu0 0.0
    %703 = vmatprep.subr.mxu0 0.0
    %704 = vmatpush1.msra.mxu0 0.0
    %705 = vmatprep.subr.mxu0 0.0
    %706 = vmatpush1.msra.mxu0 0.0
    %707 = vmatprep.subr.mxu0 0.0
    %708 = vmatpush1.msra.mxu0 0.0
    %709 = vmatprep.subr.mxu0 0.0
    %710 = vmatpush1.msra.mxu0 0.0
    %711 = vmatprep.subr.mxu0 0.0
    %712 = vmatpush1.msra.mxu0 0.0
    %713 = vmatprep.subr.mxu0 0.0
    %714 = vmatpush1.msra.mxu0 0.0
    %715 = vmatprep.subr.mxu0 0.0
    %716 = vmatpush1.msra.mxu0 0.0
    %717 = vmatprep.subr.mxu0 0.0
    %718 = vmatpush1.msra.mxu0 0.0
    %719 = vmatprep.subr.mxu0 0.0
    %720 = vmatpush1.msra.mxu0 0.0
    %721 = vmatprep.subr.mxu0 0.0
    %722 = vmatpush1.msra.mxu0 0.0
    %723 = vmatprep.subr.mxu0 0.0
    %724 = vmatpush1.msra.mxu0 0.0
    %725 = vmatprep.subr.mxu0 0.0
    %726 = vmatpush1.msra.mxu0 0.0
    %727 = vmatprep.subr.mxu0 0.0
    %728 = vmatpush1.msra.mxu0 0.0
    %729 = vmatprep.mubr.f32.mxu0 0.0
    %730 = vmatmul.mubr.f32.gmra.mrb[0].mxu0 %v658
    %v731 = vpop.f32.mrb[0].mxu0
    %v732 = vadd.f32 0.0, %v731
    %v733 = vpop.f32.mrb[0].mxu0
    %v734 = vadd.f32 0.0, %v733
    %735 = vdwg.mxu0
    %736 = vmatprep.subr.mxu0 %v69
    %737 = vmatpush1.msra.mxu0 %v68
    %738 = vmatprep.subr.mxu0 %v73
    %739 = vmatpush1.msra.mxu0 %v72
    %740 = vmatprep.subr.mxu0 %v77
    %741 = vmatpush1.msra.mxu0 %v76
    %742 = vmatprep.subr.mxu0 %v81
    %743 = vmatpush1.msra.mxu0 %v80
    %744 = vmatprep.subr.mxu0 %v85
    %745 = vmatpush1.msra.mxu0 %v84
    %746 = vmatprep.subr.mxu0 %v89
    %747 = vmatpush1.msra.mxu0 %v88
    %748 = vmatprep.subr.mxu0 %v93
    %749 = vmatpush1.msra.mxu0 %v92
    %750 = vmatprep.subr.mxu0 %v97
    %751 = vmatpush1.msra.mxu0 %v96
    %752 = vmatprep.subr.mxu0 %v101
    %753 = vmatpush1.msra.mxu0 %v100
    %754 = vmatprep.subr.mxu0 %v105
    %755 = vmatpush1.msra.mxu0 %v104
    %756 = vmatprep.subr.mxu0 %v109
    %757 = vmatpush1.msra.mxu0 %v108
    %758 = vmatprep.subr.mxu0 %v113
    %759 = vmatpush1.msra.mxu0 %v112
    %760 = vmatprep.subr.mxu0 %v117
    %761 = vmatpush1.msra.mxu0 %v116
    %762 = vmatprep.subr.mxu0 %v121
    %763 = vmatpush1.msra.mxu0 %v120
    %764 = vmatprep.subr.mxu0 %v125
    %765 = vmatpush1.msra.mxu0 %v124
    %766 = vmatprep.subr.mxu0 %v129
    %767 = vmatpush1.msra.mxu0 %v128
    %768 = vmatprep.subr.mxu0 0.0
    %769 = vmatpush1.msra.mxu0 0.0
    %770 = vmatprep.subr.mxu0 0.0
    %771 = vmatpush1.msra.mxu0 0.0
    %772 = vmatprep.subr.mxu0 0.0
    %773 = vmatpush1.msra.mxu0 0.0
    %774 = vmatprep.subr.mxu0 0.0
    %775 = vmatpush1.msra.mxu0 0.0
    %776 = vmatprep.subr.mxu0 0.0
    %777 = vmatpush1.msra.mxu0 0.0
    %778 = vmatprep.subr.mxu0 0.0
    %779 = vmatpush1.msra.mxu0 0.0
    %780 = vmatprep.subr.mxu0 0.0
    %781 = vmatpush1.msra.mxu0 0.0
    %782 = vmatprep.subr.mxu0 0.0
    %783 = vmatpush1.msra.mxu0 0.0
    %784 = vmatprep.subr.mxu0 0.0
    %785 = vmatpush1.msra.mxu0 0.0
    %786 = vmatprep.subr.mxu0 0.0
    %787 = vmatpush1.msra.mxu0 0.0
    %788 = vmatprep.subr.mxu0 0.0
    %789 = vmatpush1.msra.mxu0 0.0
    %790 = vmatprep.subr.mxu0 0.0
    %791 = vmatpush1.msra.mxu0 0.0
    %792 = vmatprep.subr.mxu0 0.0
    %793 = vmatpush1.msra.mxu0 0.0
    %794 = vmatprep.subr.mxu0 0.0
    %795 = vmatpush1.msra.mxu0 0.0
    %796 = vmatprep.subr.mxu0 0.0
    %797 = vmatpush1.msra.mxu0 0.0
    %798 = vmatprep.subr.mxu0 0.0
    %799 = vmatpush1.msra.mxu0 0.0
    %800 = vmatprep.mubr.f32.mxu0 0.0
    %801 = vmatmul.mubr.f32.gmra.mrb[0].mxu0 %v658
    %v802 = vpop.f32.mrb[0].mxu0
    %v803 = vadd.f32 0.0, %v802
    %v804 = vpop.f32.mrb[0].mxu0
    %v805 = vadd.f32 0.0, %v804
    %806 = vdwg.mxu0
    %v807 = vadd.f32 %v661, %v732
    %v808 = vadd.f32 %v662, %v734
    %v809 = vadd.f32 %v663, %v803
    %v810 = vadd.f32 %v664, %v805
    %v811 = vxor.u32 %v807, 2147483648
    %v812 = vmul.f32 %v811, 1.442695
    %v813 = vpow.pop %v812
    %v814 = vadd.f32 %v813, 1.0
    %v815 = vrcp.pop %v814
    %v816 = vmul.f32 1.0, %v815
    %v817 = vxor.u32 %v808, 2147483648
    %v818 = vmul.f32 %v817, 1.442695
    %v819 = vpow.pop %v818
    %v820 = vadd.f32 %v819, 1.0
    %v821 = vrcp.pop %v820
    %v822 = vmul.f32 1.0, %v821
    %v823 = vtanh.pop %v809
    %v824 = vxor.u32 %v810, 2147483648
    %v825 = vmul.f32 %v824, 1.442695
    %v826 = vpow.pop %v825
    %v827 = vadd.f32 %v826, 1.0
    %v828 = vrcp.pop %v827
    %v829 = vmul.f32 1.0, %v828
    %v830 = vmul.f32 %v822, %v656
    %v831 = vmul.f32 %v816, %v823
    %v832 = vadd.f32 %v830, %v831
    %v833 = vtanh.pop %v832
    %v834 = vmul.f32 %v829, %v833
    %v835 = vadd.f32 %v659, %v834
    %s836 = scalar_lea.vmem [#allocation5], 128
    %v837 = vld [vmem:[%s836] sm:$0xff]
    %v838 = vld [vmem:[%s836 + $0x8] sm:$0xff]
    %v839 = vld [vmem:[%s836 + $0x10] sm:$0xff]
    %v840 = vld [vmem:[%s836 + $0x18] sm:$0xff]
    %841 = vmatprep.subr.mxu0 %v67
    %842 = vmatpush1.msra.mxu0 %v66
    %843 = vmatprep.subr.mxu0 %v71
    %844 = vmatpush1.msra.mxu0 %v70
    %845 = vmatprep.subr.mxu0 %v75
    %846 = vmatpush1.msra.mxu0 %v74
    %847 = vmatprep.subr.mxu0 %v79
    %848 = vmatpush1.msra.mxu0 %v78
    %849 = vmatprep.subr.mxu0 %v83
    %850 = vmatpush1.msra.mxu0 %v82
    %851 = vmatprep.subr.mxu0 %v87
    %852 = vmatpush1.msra.mxu0 %v86
    %853 = vmatprep.subr.mxu0 %v91
    %854 = vmatpush1.msra.mxu0 %v90
    %855 = vmatprep.subr.mxu0 %v95
    %856 = vmatpush1.msra.mxu0 %v94
    %857 = vmatprep.subr.mxu0 %v99
    %858 = vmatpush1.msra.mxu0 %v98
    %859 = vmatprep.subr.mxu0 %v103
    %860 = vmatpush1.msra.mxu0 %v102
    %861 = vmatprep.subr.mxu0 %v107
    %862 = vmatpush1.msra.mxu0 %v106
    %863 = vmatprep.subr.mxu0 %v111
    %864 = vmatpush1.msra.mxu0 %v110
    %865 = vmatprep.subr.mxu0 %v115
    %866 = vmatpush1.msra.mxu0 %v114
    %867 = vmatprep.subr.mxu0 %v119
    %868 = vmatpush1.msra.mxu0 %v118
    %869 = vmatprep.subr.mxu0 %v123
    %870 = vmatpush1.msra.mxu0 %v122
    %871 = vmatprep.subr.mxu0 %v127
    %872 = vmatpush1.msra.mxu0 %v126
    %873 = vmatprep.subr.mxu0 0.0
    %874 = vmatpush1.msra.mxu0 0.0
    %875 = vmatprep.subr.mxu0 0.0
    %876 = vmatpush1.msra.mxu0 0.0
    %877 = vmatprep.subr.mxu0 0.0
    %878 = vmatpush1.msra.mxu0 0.0
    %879 = vmatprep.subr.mxu0 0.0
    %880 = vmatpush1.msra.mxu0 0.0
    %881 = vmatprep.subr.mxu0 0.0
    %882 = vmatpush1.msra.mxu0 0.0
    %883 = vmatprep.subr.mxu0 0.0
    %884 = vmatpush1.msra.mxu0 0.0
    %885 = vmatprep.subr.mxu0 0.0
    %886 = vmatpush1.msra.mxu0 0.0
    %887 = vmatprep.subr.mxu0 0.0
    %888 = vmatpush1.msra.mxu0 0.0
    %889 = vmatprep.subr.mxu0 0.0
    %890 = vmatpush1.msra.mxu0 0.0
    %891 = vmatprep.subr.mxu0 0.0
    %892 = vmatpush1.msra.mxu0 0.0
    %893 = vmatprep.subr.mxu0 0.0
    %894 = vmatpush1.msra.mxu0 0.0
    %895 = vmatprep.subr.mxu0 0.0
    %896 = vmatpush1.msra.mxu0 0.0
    %897 = vmatprep.subr.mxu0 0.0
    %898 = vmatpush1.msra.mxu0 0.0
    %899 = vmatprep.subr.mxu0 0.0
    %900 = vmatpush1.msra.mxu0 0.0
    %901 = vmatprep.subr.mxu0 0.0
    %902 = vmatpush1.msra.mxu0 0.0
    %903 = vmatprep.subr.mxu0 0.0
    %904 = vmatpush1.msra.mxu0 0.0
    %905 = vmatprep.mubr.f32.mxu0 0.0
    %906 = vmatmul.mubr.f32.gmra.mrb[0].mxu0 %v834
    %v907 = vpop.f32.mrb[0].mxu0
    %v908 = vadd.f32 0.0, %v907
    %v909 = vpop.f32.mrb[0].mxu0
    %v910 = vadd.f32 0.0, %v909
    %911 = vdwg.mxu0
    %912 = vmatprep.subr.mxu0 %v69
    %913 = vmatpush1.msra.mxu0 %v68
    %914 = vmatprep.subr.mxu0 %v73
    %915 = vmatpush1.msra.mxu0 %v72
    %916 = vmatprep.subr.mxu0 %v77
    %917 = vmatpush1.msra.mxu0 %v76
    %918 = vmatprep.subr.mxu0 %v81
    %919 = vmatpush1.msra.mxu0 %v80
    %920 = vmatprep.subr.mxu0 %v85
    %921 = vmatpush1.msra.mxu0 %v84
    %922 = vmatprep.subr.mxu0 %v89
    %923 = vmatpush1.msra.mxu0 %v88
    %924 = vmatprep.subr.mxu0 %v93
    %925 = vmatpush1.msra.mxu0 %v92
    %926 = vmatprep.subr.mxu0 %v97
    %927 = vmatpush1.msra.mxu0 %v96
    %928 = vmatprep.subr.mxu0 %v101
    %929 = vmatpush1.msra.mxu0 %v100
    %930 = vmatprep.subr.mxu0 %v105
    %931 = vmatpush1.msra.mxu0 %v104
    %932 = vmatprep.subr.mxu0 %v109
    %933 = vmatpush1.msra.mxu0 %v108
    %934 = vmatprep.subr.mxu0 %v113
    %935 = vmatpush1.msra.mxu0 %v112
    %936 = vmatprep.subr.mxu0 %v117
    %937 = vmatpush1.msra.mxu0 %v116
    %938 = vmatprep.subr.mxu0 %v121
    %939 = vmatpush1.msra.mxu0 %v120
    %940 = vmatprep.subr.mxu0 %v125
    %941 = vmatpush1.msra.mxu0 %v124
    %942 = vmatprep.subr.mxu0 %v129
    %943 = vmatpush1.msra.mxu0 %v128
    %944 = vmatprep.subr.mxu0 0.0
    %945 = vmatpush1.msra.mxu0 0.0
    %946 = vmatprep.subr.mxu0 0.0
    %947 = vmatpush1.msra.mxu0 0.0
    %948 = vmatprep.subr.mxu0 0.0
    %949 = vmatpush1.msra.mxu0 0.0
    %950 = vmatprep.subr.mxu0 0.0
    %951 = vmatpush1.msra.mxu0 0.0
    %952 = vmatprep.subr.mxu0 0.0
    %953 = vmatpush1.msra.mxu0 0.0
    %954 = vmatprep.subr.mxu0 0.0
    %955 = vmatpush1.msra.mxu0 0.0
    %956 = vmatprep.subr.mxu0 0.0
    %957 = vmatpush1.msra.mxu0 0.0
    %958 = vmatprep.subr.mxu0 0.0
    %959 = vmatpush1.msra.mxu0 0.0
    %960 = vmatprep.subr.mxu0 0.0
    %961 = vmatpush1.msra.mxu0 0.0
    %962 = vmatprep.subr.mxu0 0.0
    %963 = vmatpush1.msra.mxu0 0.0
    %964 = vmatprep.subr.mxu0 0.0
    %965 = vmatpush1.msra.mxu0 0.0
    %966 = vmatprep.subr.mxu0 0.0
    %967 = vmatpush1.msra.mxu0 0.0
    %968 = vmatprep.subr.mxu0 0.0
    %969 = vmatpush1.msra.mxu0 0.0
    %970 = vmatprep.subr.mxu0 0.0
    %971 = vmatpush1.msra.mxu0 0.0
    %972 = vmatprep.subr.mxu0 0.0
    %973 = vmatpush1.msra.mxu0 0.0
    %974 = vmatprep.subr.mxu0 0.0
    %975 = vmatpush1.msra.mxu0 0.0
    %976 = vmatprep.mubr.f32.mxu0 0.0
    %977 = vmatmul.mubr.f32.gmra.mrb[0].mxu0 %v834
    %v978 = vpop.f32.mrb[0].mxu0
    %v979 = vadd.f32 0.0, %v978
    %v980 = vpop.f32.mrb[0].mxu0
    %v981 = vadd.f32 0.0, %v980
    %982 = vdwg.mxu0
    %v983 = vadd.f32 %v837, %v908
    %v984 = vadd.f32 %v838, %v910
    %v985 = vadd.f32 %v839, %v979
    %v986 = vadd.f32 %v840, %v981
    %v987 = vxor.u32 %v983, 2147483648
    %v988 = vmul.f32 %v987, 1.442695
    %v989 = vpow.pop %v988
    %v990 = vadd.f32 %v989, 1.0
    %v991 = vrcp.pop %v990
    %v992 = vmul.f32 1.0, %v991
    %v993 = vxor.u32 %v984, 2147483648
    %v994 = vmul.f32 %v993, 1.442695
    %v995 = vpow.pop %v994
    %v996 = vadd.f32 %v995, 1.0
    %v997 = vrcp.pop %v996
    %v998 = vmul.f32 1.0, %v997
    %v999 = vtanh.pop %v985
    %v1000 = vxor.u32 %v986, 2147483648
    %v1001 = vmul.f32 %v1000, 1.442695
    %v1002 = vpow.pop %v1001
    %v1003 = vadd.f32 %v1002, 1.0
    %v1004 = vrcp.pop %v1003
    %v1005 = vmul.f32 1.0, %v1004
    %v1006 = vmul.f32 %v998, %v832
    %v1007 = vmul.f32 %v992, %v999
    %v1008 = vadd.f32 %v1006, %v1007
    %v1009 = vtanh.pop %v1008
    %v1010 = vmul.f32 %v1005, %v1009
    %v1011 = vadd.f32 %v835, %v1010
    %s1012 = scalar_lea.vmem [#allocation5], 160
    %v1013 = vld [vmem:[%s1012] sm:$0xff]
    %v1014 = vld [vmem:[%s1012 + $0x8] sm:$0xff]
    %v1015 = vld [vmem:[%s1012 + $0x10] sm:$0xff]
    %v1016 = vld [vmem:[%s1012 + $0x18] sm:$0xff]
    %1017 = vmatprep.subr.mxu0 %v67
    %1018 = vmatpush1.msra.mxu0 %v66
    %1019 = vmatprep.subr.mxu0 %v71
    %1020 = vmatpush1.msra.mxu0 %v70
    %1021 = vmatprep.subr.mxu0 %v75
    %1022 = vmatpush1.msra.mxu0 %v74
    %1023 = vmatprep.subr.mxu0 %v79
    %1024 = vmatpush1.msra.mxu0 %v78
    %1025 = vmatprep.subr.mxu0 %v83
    %1026 = vmatpush1.msra.mxu0 %v82
    %1027 = vmatprep.subr.mxu0 %v87
    %1028 = vmatpush1.msra.mxu0 %v86
    %1029 = vmatprep.subr.mxu0 %v91
    %1030 = vmatpush1.msra.mxu0 %v90
    %1031 = vmatprep.subr.mxu0 %v95
    %1032 = vmatpush1.msra.mxu0 %v94
    %1033 = vmatprep.subr.mxu0 %v99
    %1034 = vmatpush1.msra.mxu0 %v98
    %1035 = vmatprep.subr.mxu0 %v103
    %1036 = vmatpush1.msra.mxu0 %v102
    %1037 = vmatprep.subr.mxu0 %v107
    %1038 = vmatpush1.msra.mxu0 %v106
    %1039 = vmatprep.subr.mxu0 %v111
    %1040 = vmatpush1.msra.mxu0 %v110
    %1041 = vmatprep.subr.mxu0 %v115
    %1042 = vmatpush1.msra.mxu0 %v114
    %1043 = vmatprep.subr.mxu0 %v119
    %1044 = vmatpush1.msra.mxu0 %v118
    %1045 = vmatprep.subr.mxu0 %v123
    %1046 = vmatpush1.msra.mxu0 %v122
    %1047 = vmatprep.subr.mxu0 %v127
    %1048 = vmatpush1.msra.mxu0 %v126
    %1049 = vmatprep.subr.mxu0 0.0
    %1050 = vmatpush1.msra.mxu0 0.0
    %1051 = vmatprep.subr.mxu0 0.0
    %1052 = vmatpush1.msra.mxu0 0.0
    %1053 = vmatprep.subr.mxu0 0.0
    %1054 = vmatpush1.msra.mxu0 0.0
    %1055 = vmatprep.subr.mxu0 0.0
    %1056 = vmatpush1.msra.mxu0 0.0
    %1057 = vmatprep.subr.mxu0 0.0
    %1058 = vmatpush1.msra.mxu0 0.0
    %1059 = vmatprep.subr.mxu0 0.0
    %1060 = vmatpush1.msra.mxu0 0.0
    %1061 = vmatprep.subr.mxu0 0.0
    %1062 = vmatpush1.msra.mxu0 0.0
    %1063 = vmatprep.subr.mxu0 0.0
    %1064 = vmatpush1.msra.mxu0 0.0
    %1065 = vmatprep.subr.mxu0 0.0
    %1066 = vmatpush1.msra.mxu0 0.0
    %1067 = vmatprep.subr.mxu0 0.0
    %1068 = vmatpush1.msra.mxu0 0.0
    %1069 = vmatprep.subr.mxu0 0.0
    %1070 = vmatpush1.msra.mxu0 0.0
    %1071 = vmatprep.subr.mxu0 0.0
    %1072 = vmatpush1.msra.mxu0 0.0
    %1073 = vmatprep.subr.mxu0 0.0
    %1074 = vmatpush1.msra.mxu0 0.0
    %1075 = vmatprep.subr.mxu0 0.0
    %1076 = vmatpush1.msra.mxu0 0.0
    %1077 = vmatprep.subr.mxu0 0.0
    %1078 = vmatpush1.msra.mxu0 0.0
    %1079 = vmatprep.subr.mxu0 0.0
    %1080 = vmatpush1.msra.mxu0 0.0
    %1081 = vmatprep.mubr.f32.mxu0 0.0
    %1082 = vmatmul.mubr.f32.gmra.mrb[0].mxu0 %v1010
    %v1083 = vpop.f32.mrb[0].mxu0
    %v1084 = vadd.f32 0.0, %v1083
    %v1085 = vpop.f32.mrb[0].mxu0
    %v1086 = vadd.f32 0.0, %v1085
    %1087 = vdwg.mxu0
    %1088 = vmatprep.subr.mxu0 %v69
    %1089 = vmatpush1.msra.mxu0 %v68
    %1090 = vmatprep.subr.mxu0 %v73
    %1091 = vmatpush1.msra.mxu0 %v72
    %1092 = vmatprep.subr.mxu0 %v77
    %1093 = vmatpush1.msra.mxu0 %v76
    %1094 = vmatprep.subr.mxu0 %v81
    %1095 = vmatpush1.msra.mxu0 %v80
    %1096 = vmatprep.subr.mxu0 %v85
    %1097 = vmatpush1.msra.mxu0 %v84
    %1098 = vmatprep.subr.mxu0 %v89
    %1099 = vmatpush1.msra.mxu0 %v88
    %1100 = vmatprep.subr.mxu0 %v93
    %1101 = vmatpush1.msra.mxu0 %v92
    %1102 = vmatprep.subr.mxu0 %v97
    %1103 = vmatpush1.msra.mxu0 %v96
    %1104 = vmatprep.subr.mxu0 %v101
    %1105 = vmatpush1.msra.mxu0 %v100
    %1106 = vmatprep.subr.mxu0 %v105
    %1107 = vmatpush1.msra.mxu0 %v104
    %1108 = vmatprep.subr.mxu0 %v109
    %1109 = vmatpush1.msra.mxu0 %v108
    %1110 = vmatprep.subr.mxu0 %v113
    %1111 = vmatpush1.msra.mxu0 %v112
    %1112 = vmatprep.subr.mxu0 %v117
    %1113 = vmatpush1.msra.mxu0 %v116
    %1114 = vmatprep.subr.mxu0 %v121
    %1115 = vmatpush1.msra.mxu0 %v120
    %1116 = vmatprep.subr.mxu0 %v125
    %1117 = vmatpush1.msra.mxu0 %v124
    %1118 = vmatprep.subr.mxu0 %v129
    %1119 = vmatpush1.msra.mxu0 %v128
    %1120 = vmatprep.subr.mxu0 0.0
    %1121 = vmatpush1.msra.mxu0 0.0
    %1122 = vmatprep.subr.mxu0 0.0
    %1123 = vmatpush1.msra.mxu0 0.0
    %1124 = vmatprep.subr.mxu0 0.0
    %1125 = vmatpush1.msra.mxu0 0.0
    %1126 = vmatprep.subr.mxu0 0.0
    %1127 = vmatpush1.msra.mxu0 0.0
    %1128 = vmatprep.subr.mxu0 0.0
    %1129 = vmatpush1.msra.mxu0 0.0
    %1130 = vmatprep.subr.mxu0 0.0
    %1131 = vmatpush1.msra.mxu0 0.0
    %1132 = vmatprep.subr.mxu0 0.0
    %1133 = vmatpush1.msra.mxu0 0.0
    %1134 = vmatprep.subr.mxu0 0.0
    %1135 = vmatpush1.msra.mxu0 0.0
    %1136 = vmatprep.subr.mxu0 0.0
    %1137 = vmatpush1.msra.mxu0 0.0
    %1138 = vmatprep.subr.mxu0 0.0
    %1139 = vmatpush1.msra.mxu0 0.0
    %1140 = vmatprep.subr.mxu0 0.0
    %1141 = vmatpush1.msra.mxu0 0.0
    %1142 = vmatprep.subr.mxu0 0.0
    %1143 = vmatpush1.msra.mxu0 0.0
    %1144 = vmatprep.subr.mxu0 0.0
    %1145 = vmatpush1.msra.mxu0 0.0
    %1146 = vmatprep.subr.mxu0 0.0
    %1147 = vmatpush1.msra.mxu0 0.0
    %1148 = vmatprep.subr.mxu0 0.0
    %1149 = vmatpush1.msra.mxu0 0.0
    %1150 = vmatprep.subr.mxu0 0.0
    %1151 = vmatpush1.msra.mxu0 0.0
    %1152 = vmatprep.mubr.f32.mxu0 0.0
    %1153 = vmatmul.mubr.f32.gmra.mrb[0].mxu0 %v1010
    %v1154 = vpop.f32.mrb[0].mxu0
    %v1155 = vadd.f32 0.0, %v1154
    %v1156 = vpop.f32.mrb[0].mxu0
    %v1157 = vadd.f32 0.0, %v1156
    %1158 = vdwg.mxu0
    %v1159 = vadd.f32 %v1013, %v1084
    %v1160 = vadd.f32 %v1014, %v1086
    %v1161 = vadd.f32 %v1015, %v1155
    %v1162 = vadd.f32 %v1016, %v1157
    %v1163 = vxor.u32 %v1159, 2147483648
    %v1164 = vmul.f32 %v1163, 1.442695
    %v1165 = vpow.pop %v1164
    %v1166 = vadd.f32 %v1165, 1.0
    %v1167 = vrcp.pop %v1166
    %v1168 = vmul.f32 1.0, %v1167
    %v1169 = vxor.u32 %v1160, 2147483648
    %v1170 = vmul.f32 %v1169, 1.442695
    %v1171 = vpow.pop %v1170
    %v1172 = vadd.f32 %v1171, 1.0
    %v1173 = vrcp.pop %v1172
    %v1174 = vmul.f32 1.0, %v1173
    %v1175 = vtanh.pop %v1161
    %v1176 = vxor.u32 %v1162, 2147483648
    %v1177 = vmul.f32 %v1176, 1.442695
    %v1178 = vpow.pop %v1177
    %v1179 = vadd.f32 %v1178, 1.0
    %v1180 = vrcp.pop %v1179
    %v1181 = vmul.f32 1.0, %v1180
    %v1182 = vmul.f32 %v1174, %v1008
    %v1183 = vmul.f32 %v1168, %v1175
    %v1184 = vadd.f32 %v1182, %v1183
    %v1185 = vtanh.pop %v1184
    %v1186 = vmul.f32 %v1181, %v1185
    %v1187 = vadd.f32 %v1011, %v1186
    %s1188 = scalar_lea.vmem [#allocation5], 192
    %v1189 = vld [vmem:[%s1188] sm:$0xff]
    %v1190 = vld [vmem:[%s1188 + $0x8] sm:$0xff]
    %v1191 = vld [vmem:[%s1188 + $0x10] sm:$0xff]
    %v1192 = vld [vmem:[%s1188 + $0x18] sm:$0xff]
    %1193 = vmatprep.subr.mxu0 %v67
    %1194 = vmatpush1.msra.mxu0 %v66
    %1195 = vmatprep.subr.mxu0 %v71
    %1196 = vmatpush1.msra.mxu0 %v70
    %1197 = vmatprep.subr.mxu0 %v75
    %1198 = vmatpush1.msra.mxu0 %v74
    %1199 = vmatprep.subr.mxu0 %v79
    %1200 = vmatpush1.msra.mxu0 %v78
    %1201 = vmatprep.subr.mxu0 %v83
    %1202 = vmatpush1.msra.mxu0 %v82
    %1203 = vmatprep.subr.mxu0 %v87
    %1204 = vmatpush1.msra.mxu0 %v86
    %1205 = vmatprep.subr.mxu0 %v91
    %1206 = vmatpush1.msra.mxu0 %v90
    %1207 = vmatprep.subr.mxu0 %v95
    %1208 = vmatpush1.msra.mxu0 %v94
    %1209 = vmatprep.subr.mxu0 %v99
    %1210 = vmatpush1.msra.mxu0 %v98
    %1211 = vmatprep.subr.mxu0 %v103
    %1212 = vmatpush1.msra.mxu0 %v102
    %1213 = vmatprep.subr.mxu0 %v107
    %1214 = vmatpush1.msra.mxu0 %v106
    %1215 = vmatprep.subr.mxu0 %v111
    %1216 = vmatpush1.msra.mxu0 %v110
    %1217 = vmatprep.subr.mxu0 %v115
    %1218 = vmatpush1.msra.mxu0 %v114
    %1219 = vmatprep.subr.mxu0 %v119
    %1220 = vmatpush1.msra.mxu0 %v118
    %1221 = vmatprep.subr.mxu0 %v123
    %1222 = vmatpush1.msra.mxu0 %v122
    %1223 = vmatprep.subr.mxu0 %v127
    %1224 = vmatpush1.msra.mxu0 %v126
    %1225 = vmatprep.subr.mxu0 0.0
    %1226 = vmatpush1.msra.mxu0 0.0
    %1227 = vmatprep.subr.mxu0 0.0
    %1228 = vmatpush1.msra.mxu0 0.0
    %1229 = vmatprep.subr.mxu0 0.0
    %1230 = vmatpush1.msra.mxu0 0.0
    %1231 = vmatprep.subr.mxu0 0.0
    %1232 = vmatpush1.msra.mxu0 0.0
    %1233 = vmatprep.subr.mxu0 0.0
    %1234 = vmatpush1.msra.mxu0 0.0
    %1235 = vmatprep.subr.mxu0 0.0
    %1236 = vmatpush1.msra.mxu0 0.0
    %1237 = vmatprep.subr.mxu0 0.0
    %1238 = vmatpush1.msra.mxu0 0.0
    %1239 = vmatprep.subr.mxu0 0.0
    %1240 = vmatpush1.msra.mxu0 0.0
    %1241 = vmatprep.subr.mxu0 0.0
    %1242 = vmatpush1.msra.mxu0 0.0
    %1243 = vmatprep.subr.mxu0 0.0
    %1244 = vmatpush1.msra.mxu0 0.0
    %1245 = vmatprep.subr.mxu0 0.0
    %1246 = vmatpush1.msra.mxu0 0.0
    %1247 = vmatprep.subr.mxu0 0.0
    %1248 = vmatpush1.msra.mxu0 0.0
    %1249 = vmatprep.subr.mxu0 0.0
    %1250 = vmatpush1.msra.mxu0 0.0
    %1251 = vmatprep.subr.mxu0 0.0
    %1252 = vmatpush1.msra.mxu0 0.0
    %1253 = vmatprep.subr.mxu0 0.0
    %1254 = vmatpush1.msra.mxu0 0.0
    %1255 = vmatprep.subr.mxu0 0.0
    %1256 = vmatpush1.msra.mxu0 0.0
    %1257 = vmatprep.mubr.f32.mxu0 0.0
    %1258 = vmatmul.mubr.f32.gmra.mrb[0].mxu0 %v1186
    %v1259 = vpop.f32.mrb[0].mxu0
    %v1260 = vadd.f32 0.0, %v1259
    %v1261 = vpop.f32.mrb[0].mxu0
    %v1262 = vadd.f32 0.0, %v1261
    %1263 = vdwg.mxu0
    %1264 = vmatprep.subr.mxu0 %v69
    %1265 = vmatpush1.msra.mxu0 %v68
    %1266 = vmatprep.subr.mxu0 %v73
    %1267 = vmatpush1.msra.mxu0 %v72
    %1268 = vmatprep.subr.mxu0 %v77
    %1269 = vmatpush1.msra.mxu0 %v76
    %1270 = vmatprep.subr.mxu0 %v81
    %1271 = vmatpush1.msra.mxu0 %v80
    %1272 = vmatprep.subr.mxu0 %v85
    %1273 = vmatpush1.msra.mxu0 %v84
    %1274 = vmatprep.subr.mxu0 %v89
    %1275 = vmatpush1.msra.mxu0 %v88
    %1276 = vmatprep.subr.mxu0 %v93
    %1277 = vmatpush1.msra.mxu0 %v92
    %1278 = vmatprep.subr.mxu0 %v97
    %1279 = vmatpush1.msra.mxu0 %v96
    %1280 = vmatprep.subr.mxu0 %v101
    %1281 = vmatpush1.msra.mxu0 %v100
    %1282 = vmatprep.subr.mxu0 %v105
    %1283 = vmatpush1.msra.mxu0 %v104
    %1284 = vmatprep.subr.mxu0 %v109
    %1285 = vmatpush1.msra.mxu0 %v108
    %1286 = vmatprep.subr.mxu0 %v113
    %1287 = vmatpush1.msra.mxu0 %v112
    %1288 = vmatprep.subr.mxu0 %v117
    %1289 = vmatpush1.msra.mxu0 %v116
    %1290 = vmatprep.subr.mxu0 %v121
    %1291 = vmatpush1.msra.mxu0 %v120
    %1292 = vmatprep.subr.mxu0 %v125
    %1293 = vmatpush1.msra.mxu0 %v124
    %1294 = vmatprep.subr.mxu0 %v129
    %1295 = vmatpush1.msra.mxu0 %v128
    %1296 = vmatprep.subr.mxu0 0.0
    %1297 = vmatpush1.msra.mxu0 0.0
    %1298 = vmatprep.subr.mxu0 0.0
    %1299 = vmatpush1.msra.mxu0 0.0
    %1300 = vmatprep.subr.mxu0 0.0
    %1301 = vmatpush1.msra.mxu0 0.0
    %1302 = vmatprep.subr.mxu0 0.0
    %1303 = vmatpush1.msra.mxu0 0.0
    %1304 = vmatprep.subr.mxu0 0.0
    %1305 = vmatpush1.msra.mxu0 0.0
    %1306 = vmatprep.subr.mxu0 0.0
    %1307 = vmatpush1.msra.mxu0 0.0
    %1308 = vmatprep.subr.mxu0 0.0
    %1309 = vmatpush1.msra.mxu0 0.0
    %1310 = vmatprep.subr.mxu0 0.0
    %1311 = vmatpush1.msra.mxu0 0.0
    %1312 = vmatprep.subr.mxu0 0.0
    %1313 = vmatpush1.msra.mxu0 0.0
    %1314 = vmatprep.subr.mxu0 0.0
    %1315 = vmatpush1.msra.mxu0 0.0
    %1316 = vmatprep.subr.mxu0 0.0
    %1317 = vmatpush1.msra.mxu0 0.0
    %1318 = vmatprep.subr.mxu0 0.0
    %1319 = vmatpush1.msra.mxu0 0.0
    %1320 = vmatprep.subr.mxu0 0.0
    %1321 = vmatpush1.msra.mxu0 0.0
    %1322 = vmatprep.subr.mxu0 0.0
    %1323 = vmatpush1.msra.mxu0 0.0
    %1324 = vmatprep.subr.mxu0 0.0
    %1325 = vmatpush1.msra.mxu0 0.0
    %1326 = vmatprep.subr.mxu0 0.0
    %1327 = vmatpush1.msra.mxu0 0.0
    %1328 = vmatprep.mubr.f32.mxu0 0.0
    %1329 = vmatmul.mubr.f32.gmra.mrb[0].mxu0 %v1186
    %v1330 = vpop.f32.mrb[0].mxu0
    %v1331 = vadd.f32 0.0, %v1330
    %v1332 = vpop.f32.mrb[0].mxu0
    %v1333 = vadd.f32 0.0, %v1332
    %1334 = vdwg.mxu0
    %v1335 = vadd.f32 %v1189, %v1260
    %v1336 = vadd.f32 %v1190, %v1262
    %v1337 = vadd.f32 %v1191, %v1331
    %v1338 = vadd.f32 %v1192, %v1333
    %v1339 = vxor.u32 %v1335, 2147483648
    %v1340 = vmul.f32 %v1339, 1.442695
    %v1341 = vpow.pop %v1340
    %v1342 = vadd.f32 %v1341, 1.0
    %v1343 = vrcp.pop %v1342
    %v1344 = vmul.f32 1.0, %v1343
    %v1345 = vxor.u32 %v1336, 2147483648
    %v1346 = vmul.f32 %v1345, 1.442695
    %v1347 = vpow.pop %v1346
    %v1348 = vadd.f32 %v1347, 1.0
    %v1349 = vrcp.pop %v1348
    %v1350 = vmul.f32 1.0, %v1349
    %v1351 = vtanh.pop %v1337
    %v1352 = vxor.u32 %v1338, 2147483648
    %v1353 = vmul.f32 %v1352, 1.442695
    %v1354 = vpow.pop %v1353
    %v1355 = vadd.f32 %v1354, 1.0
    %v1356 = vrcp.pop %v1355
    %v1357 = vmul.f32 1.0, %v1356
    %v1358 = vmul.f32 %v1350, %v1184
    %v1359 = vmul.f32 %v1344, %v1351
    %v1360 = vadd.f32 %v1358, %v1359
    %v1361 = vtanh.pop %v1360
    %v1362 = vmul.f32 %v1357, %v1361
    %v1363 = vadd.f32 %v1187, %v1362
    %s1364 = scalar_lea.vmem [#allocation5], 224
    %v1365 = vld [vmem:[%s1364] sm:$0xff]
    %v1366 = vld [vmem:[%s1364 + $0x8] sm:$0xff]
    %v1367 = vld [vmem:[%s1364 + $0x10] sm:$0xff]
    %v1368 = vld [vmem:[%s1364 + $0x18] sm:$0xff]
    %1369 = vmatprep.subr.mxu0 %v67
    %1370 = vmatpush1.msra.mxu0 %v66
    %1371 = vmatprep.subr.mxu0 %v71
    %1372 = vmatpush1.msra.mxu0 %v70
    %1373 = vmatprep.subr.mxu0 %v75
    %1374 = vmatpush1.msra.mxu0 %v74
    %1375 = vmatprep.subr.mxu0 %v79
    %1376 = vmatpush1.msra.mxu0 %v78
    %1377 = vmatprep.subr.mxu0 %v83
    %1378 = vmatpush1.msra.mxu0 %v82
    %1379 = vmatprep.subr.mxu0 %v87
    %1380 = vmatpush1.msra.mxu0 %v86
    %1381 = vmatprep.subr.mxu0 %v91
    %1382 = vmatpush1.msra.mxu0 %v90
    %1383 = vmatprep.subr.mxu0 %v95
    %1384 = vmatpush1.msra.mxu0 %v94
    %1385 = vmatprep.subr.mxu0 %v99
    %1386 = vmatpush1.msra.mxu0 %v98
    %1387 = vmatprep.subr.mxu0 %v103
    %1388 = vmatpush1.msra.mxu0 %v102
    %1389 = vmatprep.subr.mxu0 %v107
    %1390 = vmatpush1.msra.mxu0 %v106
    %1391 = vmatprep.subr.mxu0 %v111
    %1392 = vmatpush1.msra.mxu0 %v110
    %1393 = vmatprep.subr.mxu0 %v115
    %1394 = vmatpush1.msra.mxu0 %v114
    %1395 = vmatprep.subr.mxu0 %v119
    %1396 = vmatpush1.msra.mxu0 %v118
    %1397 = vmatprep.subr.mxu0 %v123
    %1398 = vmatpush1.msra.mxu0 %v122
    %1399 = vmatprep.subr.mxu0 %v127
    %1400 = vmatpush1.msra.mxu0 %v126
    %1401 = vmatprep.subr.mxu0 0.0
    %1402 = vmatpush1.msra.mxu0 0.0
    %1403 = vmatprep.subr.mxu0 0.0
    %1404 = vmatpush1.msra.mxu0 0.0
    %1405 = vmatprep.subr.mxu0 0.0
    %1406 = vmatpush1.msra.mxu0 0.0
    %1407 = vmatprep.subr.mxu0 0.0
    %1408 = vmatpush1.msra.mxu0 0.0
    %1409 = vmatprep.subr.mxu0 0.0
    %1410 = vmatpush1.msra.mxu0 0.0
    %1411 = vmatprep.subr.mxu0 0.0
    %1412 = vmatpush1.msra.mxu0 0.0
    %1413 = vmatprep.subr.mxu0 0.0
    %1414 = vmatpush1.msra.mxu0 0.0
    %1415 = vmatprep.subr.mxu0 0.0
    %1416 = vmatpush1.msra.mxu0 0.0
    %1417 = vmatprep.subr.mxu0 0.0
    %1418 = vmatpush1.msra.mxu0 0.0
    %1419 = vmatprep.subr.mxu0 0.0
    %1420 = vmatpush1.msra.mxu0 0.0
    %1421 = vmatprep.subr.mxu0 0.0
    %1422 = vmatpush1.msra.mxu0 0.0
    %1423 = vmatprep.subr.mxu0 0.0
    %1424 = vmatpush1.msra.mxu0 0.0
    %1425 = vmatprep.subr.mxu0 0.0
    %1426 = vmatpush1.msra.mxu0 0.0
    %1427 = vmatprep.subr.mxu0 0.0
    %1428 = vmatpush1.msra.mxu0 0.0
    %1429 = vmatprep.subr.mxu0 0.0
    %1430 = vmatpush1.msra.mxu0 0.0
    %1431 = vmatprep.subr.mxu0 0.0
    %1432 = vmatpush1.msra.mxu0 0.0
    %1433 = vmatprep.mubr.f32.mxu0 0.0
    %1434 = vmatmul.mubr.f32.gmra.mrb[0].mxu0 %v1362
    %v1435 = vpop.f32.mrb[0].mxu0
    %v1436 = vadd.f32 0.0, %v1435
    %v1437 = vpop.f32.mrb[0].mxu0
    %v1438 = vadd.f32 0.0, %v1437
    %1439 = vdwg.mxu0
    %1440 = vmatprep.subr.mxu0 %v69
    %1441 = vmatpush1.msra.mxu0 %v68
    %1442 = vmatprep.subr.mxu0 %v73
    %1443 = vmatpush1.msra.mxu0 %v72
    %1444 = vmatprep.subr.mxu0 %v77
    %1445 = vmatpush1.msra.mxu0 %v76
    %1446 = vmatprep.subr.mxu0 %v81
    %1447 = vmatpush1.msra.mxu0 %v80
    %1448 = vmatprep.subr.mxu0 %v85
    %1449 = vmatpush1.msra.mxu0 %v84
    %1450 = vmatprep.subr.mxu0 %v89
    %1451 = vmatpush1.msra.mxu0 %v88
    %1452 = vmatprep.subr.mxu0 %v93
    %1453 = vmatpush1.msra.mxu0 %v92
    %1454 = vmatprep.subr.mxu0 %v97
    %1455 = vmatpush1.msra.mxu0 %v96
    %1456 = vmatprep.subr.mxu0 %v101
    %1457 = vmatpush1.msra.mxu0 %v100
    %1458 = vmatprep.subr.mxu0 %v105
    %1459 = vmatpush1.msra.mxu0 %v104
    %1460 = vmatprep.subr.mxu0 %v109
    %1461 = vmatpush1.msra.mxu0 %v108
    %1462 = vmatprep.subr.mxu0 %v113
    %1463 = vmatpush1.msra.mxu0 %v112
    %1464 = vmatprep.subr.mxu0 %v117
    %1465 = vmatpush1.msra.mxu0 %v116
    %1466 = vmatprep.subr.mxu0 %v121
    %1467 = vmatpush1.msra.mxu0 %v120
    %1468 = vmatprep.subr.mxu0 %v125
    %1469 = vmatpush1.msra.mxu0 %v124
    %1470 = vmatprep.subr.mxu0 %v129
    %1471 = vmatpush1.msra.mxu0 %v128
    %1472 = vmatprep.subr.mxu0 0.0
    %1473 = vmatpush1.msra.mxu0 0.0
    %1474 = vmatprep.subr.mxu0 0.0
    %1475 = vmatpush1.msra.mxu0 0.0
    %1476 = vmatprep.subr.mxu0 0.0
    %1477 = vmatpush1.msra.mxu0 0.0
    %1478 = vmatprep.subr.mxu0 0.0
    %1479 = vmatpush1.msra.mxu0 0.0
    %1480 = vmatprep.subr.mxu0 0.0
    %1481 = vmatpush1.msra.mxu0 0.0
    %1482 = vmatprep.subr.mxu0 0.0
    %1483 = vmatpush1.msra.mxu0 0.0
    %1484 = vmatprep.subr.mxu0 0.0
    %1485 = vmatpush1.msra.mxu0 0.0
    %1486 = vmatprep.subr.mxu0 0.0
    %1487 = vmatpush1.msra.mxu0 0.0
    %1488 = vmatprep.subr.mxu0 0.0
    %1489 = vmatpush1.msra.mxu0 0.0
    %1490 = vmatprep.subr.mxu0 0.0
    %1491 = vmatpush1.msra.mxu0 0.0
    %1492 = vmatprep.subr.mxu0 0.0
    %1493 = vmatpush1.msra.mxu0 0.0
    %1494 = vmatprep.subr.mxu0 0.0
    %1495 = vmatpush1.msra.mxu0 0.0
    %1496 = vmatprep.subr.mxu0 0.0
    %1497 = vmatpush1.msra.mxu0 0.0
    %1498 = vmatprep.subr.mxu0 0.0
    %1499 = vmatpush1.msra.mxu0 0.0
    %1500 = vmatprep.subr.mxu0 0.0
    %1501 = vmatpush1.msra.mxu0 0.0
    %1502 = vmatprep.subr.mxu0 0.0
    %1503 = vmatpush1.msra.mxu0 0.0
    %1504 = vmatprep.mubr.f32.mxu0 0.0
    %1505 = vmatmul.mubr.f32.gmra.mrb[0].mxu0 %v1362
    %v1506 = vpop.f32.mrb[0].mxu0
    %v1507 = vadd.f32 0.0, %v1506
    %v1508 = vpop.f32.mrb[0].mxu0
    %v1509 = vadd.f32 0.0, %v1508
    %1510 = vdwg.mxu0
    %v1511 = vadd.f32 %v1365, %v1436
    %v1512 = vadd.f32 %v1366, %v1438
    %v1513 = vadd.f32 %v1367, %v1507
    %v1514 = vadd.f32 %v1368, %v1509
    %v1515 = vxor.u32 %v1511, 2147483648
    %v1516 = vmul.f32 %v1515, 1.442695
    %v1517 = vpow.pop %v1516
    %v1518 = vadd.f32 %v1517, 1.0
    %v1519 = vrcp.pop %v1518
    %v1520 = vmul.f32 1.0, %v1519
    %v1521 = vxor.u32 %v1512, 2147483648
    %v1522 = vmul.f32 %v1521, 1.442695
    %v1523 = vpow.pop %v1522
    %v1524 = vadd.f32 %v1523, 1.0
    %v1525 = vrcp.pop %v1524
    %v1526 = vmul.f32 1.0, %v1525
    %v1527 = vtanh.pop %v1513
    %v1528 = vxor.u32 %v1514, 2147483648
    %v1529 = vmul.f32 %v1528, 1.442695
    %v1530 = vpow.pop %v1529
    %v1531 = vadd.f32 %v1530, 1.0
    %v1532 = vrcp.pop %v1531
    %v1533 = vmul.f32 1.0, %v1532
    %v1534 = vmul.f32 %v1526, %v1360
    %v1535 = vmul.f32 %v1520, %v1527
    %v1536 = vadd.f32 %v1534, %v1535
    %v1537 = vtanh.pop %v1536
    %v1538 = vmul.f32 %v1533, %v1537
    %v1539 = vadd.f32 %v1363, %v1538
    %1540 = vst [vmem:[#allocation2] sm:$0xff] %v1538
    %1541 = vst [vmem:[#allocation3] sm:$0xff] %v1536
    %1542 = vst [vmem:[#allocation4] sm:$0xff] %v1539
    // Predicated region
    $region34: #{tpu_custom_call.1} parent=1 // pred_check
      %p1543 = pneg %p59
    $region35: #{tpu_custom_call.1} parent=1 // pred_check_branch
      %1545 = sbr.rel (%p1543) target = $region37
    $region36: #{tpu_custom_call.1} parent=1 // pred_region
      %v1546 = vmul.f32 %v1539, 0.125
      %v1547 = vld [vmem:[#allocation10] sm:$0xff]
      %v1548 = vld [vmem:[#allocation10 + $0x8] sm:$0xff]
      %v1549 = vld [vmem:[#allocation10 + $0x10] sm:$0xff]
      %v1550 = vld [vmem:[#allocation10 + $0x18] sm:$0xff]
      %v1551 = vld [vmem:[#allocation10 + $0x20] sm:$0xff]
      %v1552 = vld [vmem:[#allocation10 + $0x28] sm:$0xff]
      %v1553 = vld [vmem:[#allocation10 + $0x30] sm:$0xff]
      %v1554 = vld [vmem:[#allocation10 + $0x38] sm:$0xff]
      %v1555 = vld [vmem:[#allocation10 + $0x40] sm:$0xff]
      %v1556 = vld [vmem:[#allocation10 + $0x48] sm:$0xff]
      %v1557 = vld [vmem:[#allocation10 + $0x50] sm:$0xff]
      %v1558 = vld [vmem:[#allocation10 + $0x58] sm:$0xff]
      %v1559 = vld [vmem:[#allocation10 + $0x60] sm:$0xff]
      %v1560 = vld [vmem:[#allocation10 + $0x68] sm:$0xff]
      %v1561 = vld [vmem:[#allocation10 + $0x70] sm:$0xff]
      %v1562 = vld [vmem:[#allocation10 + $0x78] sm:$0xff]
      %v1563 = vld [vmem:[%s3] sm:$0x1]
      %v1565 = vlaneseq
      %v1566 = vshrl.u32 %v1565, 7
      %v1567 = vsub.s32 0, %v1566
      %v1568 = vrot.slane %v1563, %v1567
      %1570 = vmatprep.subr.mxu0 0.0
      %1571 = vmatpush1.msra.mxu0 %v1547
      %1572 = vmatprep.subr.mxu0 0.0
      %1573 = vmatpush1.msra.mxu0 %v1548
      %1574 = vmatprep.subr.mxu0 0.0
      %1575 = vmatpush1.msra.mxu0 %v1549
      %1576 = vmatprep.subr.mxu0 0.0
      %1577 = vmatpush1.msra.mxu0 %v1550
      %1578 = vmatprep.subr.mxu0 0.0
      %1579 = vmatpush1.msra.mxu0 %v1551
      %1580 = vmatprep.subr.mxu0 0.0
      %1581 = vmatpush1.msra.mxu0 %v1552
      %1582 = vmatprep.subr.mxu0 0.0
      %1583 = vmatpush1.msra.mxu0 %v1553
      %1584 = vmatprep.subr.mxu0 0.0
      %1585 = vmatpush1.msra.mxu0 %v1554
      %1586 = vmatprep.subr.mxu0 0.0
      %1587 = vmatpush1.msra.mxu0 %v1555
      %1588 = vmatprep.subr.mxu0 0.0
      %1589 = vmatpush1.msra.mxu0 %v1556
      %1590 = vmatprep.subr.mxu0 0.0
      %1591 = vmatpush1.msra.mxu0 %v1557
      %1592 = vmatprep.subr.mxu0 0.0
      %1593 = vmatpush1.msra.mxu0 %v1558
      %1594 = vmatprep.subr.mxu0 0.0
      %1595 = vmatpush1.msra.mxu0 %v1559
      %1596 = vmatprep.subr.mxu0 0.0
      %1597 = vmatpush1.msra.mxu0 %v1560
      %1598 = vmatprep.subr.mxu0 0.0
      %1599 = vmatpush1.msra.mxu0 %v1561
      %1600 = vmatprep.subr.mxu0 0.0
      %1601 = vmatpush1.msra.mxu0 %v1562
      %1602 = vmatprep.subr.mxu0 0.0
      %1603 = vmatpush1.msra.mxu0 0.0
      %1604 = vmatprep.subr.mxu0 0.0
      %1605 = vmatpush1.msra.mxu0 0.0
      %1606 = vmatprep.subr.mxu0 0.0
      %1607 = vmatpush1.msra.mxu0 0.0
      %1608 = vmatprep.subr.mxu0 0.0
      %1609 = vmatpush1.msra.mxu0 0.0
      %1610 = vmatprep.subr.mxu0 0.0
      %1611 = vmatpush1.msra.mxu0 0.0
      %1612 = vmatprep.subr.mxu0 0.0
      %1613 = vmatpush1.msra.mxu0 0.0
      %1614 = vmatprep.subr.mxu0 0.0
      %1615 = vmatpush1.msra.mxu0 0.0
      %1616 = vmatprep.subr.mxu0 0.0
      %1617 = vmatpush1.msra.mxu0 0.0
      %1618 = vmatprep.subr.mxu0 0.0
      %1619 = vmatpush1.msra.mxu0 0.0
      %1620 = vmatprep.subr.mxu0 0.0
      %1621 = vmatpush1.msra.mxu0 0.0
      %1622 = vmatprep.subr.mxu0 0.0
      %1623 = vmatpush1.msra.mxu0 0.0
      %1624 = vmatprep.subr.mxu0 0.0
      %1625 = vmatpush1.msra.mxu0 0.0
      %1626 = vmatprep.subr.mxu0 0.0
      %1627 = vmatpush1.msra.mxu0 0.0
      %1628 = vmatprep.subr.mxu0 0.0
      %1629 = vmatpush1.msra.mxu0 0.0
      %1630 = vmatprep.subr.mxu0 0.0
      %1631 = vmatpush1.msra.mxu0 0.0
      %1632 = vmatprep.subr.mxu0 0.0
      %1633 = vmatpush1.msra.mxu0 0.0
      %1634 = vmatprep.mubr.f32.mxu0 0.0
      %1635 = vmatmul.mubr.f32.gmra.mrb[0].mxu0 %v1546
      %v1636 = vpop.f32.mrb[0].mxu0
      %v1637 = vadd.f32 %v1568, %v1636
      %v1638 = vpop.f32.mrb[0].mxu0
      %1639 = vdwg.mxu0
      %1640 = vst [vmem:[#allocation11] sm:$0xff] %v1637
    $region37: #{tpu_custom_call.1} parent=1 // pred_fallthru
      _
    // Predicated region
    $region38: #{tpu_custom_call.1} parent=1 // pred_check
      _
    $region39: #{tpu_custom_call.1} parent=1 // pred_check_branch
      %1642 = sbr.rel (0) target = $region41
    $region40: #{tpu_custom_call.1} parent=1 // pred_region
      %s1644 = ssub.s32 128, 128
      %1645 = vsyncadd [#allocation7], %s1644
      %s1647 = sshll.u32 [#allocation11], 4
      %s1648 = int_to_ptr.vmem [resolvable:$true] %s1647
      %1650 = dma.vmem_to_hbm [thread:$0]  %s1648, 128, %s4, [#allocation7]
    $region41: #{tpu_custom_call.1} parent=1 // pred_fallthru
      _
    // Predicated region
    $region42: #{tpu_custom_call.1} parent=1 // pred_check
      _
    $region43: #{tpu_custom_call.1} parent=1 // pred_check_branch
      %1652 = sbr.rel (0) target = $region45
    $region44: #{tpu_custom_call.1} parent=1 // pred_region
      %1653 = dma.done [#allocation7], 128
    $region45: #{tpu_custom_call.1} parent=1 // pred_fallthru
      _
    %1654 = vsyncpa [#allocation6], 1
    %1655 = vsyncpa [#allocation9], 1
    %1656 = vsyncpa [#allocation7], 1

</llo_original>
